<compile_context>
chip_gen: v7x
topology: tpu7x:2x2x1
jax: 0.10.0
libtpu: 0.0.40
codegen_flags: <defaults>
</compile_context>

<pallas_src>
import functools

import jax
import jax.numpy as jnp
from jax.experimental import pallas as pl
from jax.experimental.pallas import tpu as pltpu


# ----------------------------------------------------------------------------
# Pass 1: assignment / projection pass (1-D grid over node row tiles)
# ----------------------------------------------------------------------------
def _assign_kernel(x_ref, wf_ref, bf_ref,
                   s_ref, saug_ref, z_ref, ortho_ref,
                   ss_acc, *, num_clusters):
    i = pl.program_id(0)
    ni = pl.num_programs(0)
    K = num_clusters

    @pl.when(i == 0)
    def _():
        z_ref[...] = jnp.zeros_like(z_ref)
        ss_acc[...] = jnp.zeros_like(ss_acc)

    x = x_ref[...]                                                   # [T, F]
    fused = jnp.dot(x, wf_ref[...],
                    preferred_element_type=jnp.float32) + bf_ref[...]
    logits = fused[:, :K]                                            # [T, K]
    x_proj = fused[:, K:]                                            # [T, F]

    m = jnp.max(logits, axis=-1, keepdims=True)
    e = jnp.exp(logits - m)
    s = e / jnp.sum(e, axis=-1, keepdims=True)                       # [T, K]

    s_ref[...] = s

    # S augmented with a trailing ones column, stored in the adjacency's dtype.
    # The ones column turns the per-row degree into a free extra MXU output
    # column of the adjacency matmul in pass 2 (K=30 -> 31 stays inside the
    # same 128-lane padded vreg).
    ones_col = jnp.ones((s.shape[0], 1), jnp.float32)
    saug_ref[...] = jnp.concatenate([s, ones_col], axis=-1).astype(saug_ref.dtype)

    # Z += S_i^T @ X_proj_i   (resident accumulator)
    z_ref[...] += jax.lax.dot_general(
        s, x_proj, (((0,), (0,)), ((), ())),
        preferred_element_type=jnp.float32)
    # S^T S accumulator for the orthogonality loss
    ss_acc[...] += jax.lax.dot_general(
        s, s, (((0,), (0,)), ((), ())),
        preferred_element_type=jnp.float32)

    @pl.when(i == ni - 1)
    def _():
        ss = ss_acc[...]                                             # [K, K]
        row = jax.lax.broadcasted_iota(jnp.int32, (K, K), 0)
        col = jax.lax.broadcasted_iota(jnp.int32, (K, K), 1)
        eye = (row == col).astype(jnp.float32)
        diff = ss - eye
        ortho_ref[...] = jnp.sqrt(jnp.sum(diff * diff)).reshape(1, 1)


# ----------------------------------------------------------------------------
# Pass 2: adjacency pass (2-D grid over node row tiles x node column tiles)
# ----------------------------------------------------------------------------
def _adjacency_kernel(adj_ref, saug_c_ref, s_r_ref,
                      adjnew_ref, mincut_ref,
                      adjs_acc, cut_acc, vol_acc, *, num_clusters):
    i = pl.program_id(0)          # node row tile
    j = pl.program_id(1)          # node column tile (contraction axis, last)
    ni = pl.num_programs(0)
    nj = pl.num_programs(1)
    K = num_clusters

    @pl.when(jnp.logical_and(i == 0, j == 0))
    def _():
        adjnew_ref[...] = jnp.zeros_like(adjnew_ref)
        cut_acc[...] = jnp.zeros_like(cut_acc)
        vol_acc[...] = jnp.zeros_like(vol_acc)

    @pl.when(j == 0)
    def _():
        adjs_acc[...] = jnp.zeros_like(adjs_acc)

    # Native (bf16 x bf16) MXU matmul with f32 accumulation -- no f32 upcast of
    # the streamed adjacency block.  Column K of the result is the per-row
    # degree thanks to the ones column of S_aug.
    adjs_acc[...] += jnp.dot(adj_ref[...], saug_c_ref[...],
                             preferred_element_type=jnp.float32)

    @pl.when(j == nj - 1)
    def _():
        adjs = adjs_acc[...]                                         # [T, K+1]
        adj_s = adjs[:, :K]                                          # [T, K]
        deg = adjs[:, K:]                                            # [T, 1]
        s_rows = s_r_ref[...]                                        # [T, K] f32

        # adj_new += S_i^T @ (A S)_i
        adjnew_ref[...] += jax.lax.dot_general(
            s_rows, adj_s, (((0,), (0,)), ((), ())),
            preferred_element_type=jnp.float32)
        # cut = trace(S^T A S) = sum(S .* (A S)), accumulated per row tile
        cut_acc[...] += jnp.sum(s_rows * adj_s)
        # vol = trace(S^T D) = sum(deg)  (softmax rows of S sum to 1)
        vol_acc[...] += jnp.sum(deg)

    @pl.when(jnp.logical_and(i == ni - 1, j == nj - 1))
    def _():
        mincut_ref[...] = -cut_acc[...] / (vol_acc[...] + 1e-9)


# ----------------------------------------------------------------------------
# Wrapper
# ----------------------------------------------------------------------------
def mincut_pool(x, adj, w_assign, b_assign, w_proj, b_proj,
                *, tile_r=256, tile_c=1024):
    """Forward pass of MinCutPoolLayerSparse.

    Returns (Z, adj_new[None], mincut_loss, ortho_loss, S).

    `adj` is consumed in whatever dtype it is stored in (bf16 recommended --
    exact for a binary {0,1} graph -- so the O(N^2) stream is half the bytes
    of f32 and feeds the fast bf16 MXU path).  No per-call cast is performed.
    """
    x = x.astype(jnp.float32)
    N, F = x.shape
    K = w_assign.shape[1]

    tile_r = min(tile_r, N)
    tile_c = min(tile_c, N)
    assert N % tile_r == 0 and N % tile_c == 0, \
        "N must be a multiple of the row/column tiles"
    assert tile_r % 8 == 0 or tile_r == N
    assert tile_c % 128 == 0 or tile_c == N
    # TODO(synk): pad/mask a ragged tail instead of asserting divisibility.
    nr = N // tile_r
    nc = N // tile_c

    # Fused assignment/projection weight -> one x-GEMM per node tile.
    w_fused = jnp.concatenate([w_assign, w_proj], axis=1).astype(jnp.float32)  # [F, K+F]
    b_fused = jnp.concatenate([b_assign, b_proj], axis=1).astype(jnp.float32)  # [1, K+F]

    compiler_params_1d = pltpu.CompilerParams(
        dimension_semantics=("arbitrary",),        # Z / S^T S resident across i
        vmem_limit_bytes=48 * 1024 * 1024,
    )
    compiler_params_2d = pltpu.CompilerParams(
        # both grid axes carry resident accumulators -> reductions
        dimension_semantics=("arbitrary", "arbitrary"),
        vmem_limit_bytes=48 * 1024 * 1024,         # fits v7x's 64 MiB VMEM
    )

    # ---------------- pass 1: S, S_aug(bf16), Z, ortho ----------------------
    assign_kernel = functools.partial(_assign_kernel, num_clusters=K)
    s_f32, s_aug, z_out, ortho = pl.pallas_call(
        assign_kernel,
        out_shape=(
            jax.ShapeDtypeStruct((N, K), jnp.float32),      # S
            jax.ShapeDtypeStruct((N, K + 1), adj.dtype),    # [S | 1] in adj dtype
            jax.ShapeDtypeStruct((K, F), jnp.float32),      # Z
            jax.ShapeDtypeStruct((1, 1), jnp.float32),      # ortho loss
        ),
        grid_spec=pltpu.PrefetchScalarGridSpec(
            num_scalar_prefetch=0,
            grid=(nr,),
            in_specs=[
                pl.BlockSpec((tile_r, F), lambda i: (i, 0)),         # x row tile
                pl.BlockSpec((F, K + F), lambda i: (0, 0)),          # fused weight
                pl.BlockSpec((1, K + F), lambda i: (0, 0)),          # fused bias
            ],
            out_specs=(
                pl.BlockSpec((tile_r, K), lambda i: (i, 0)),         # S
                pl.BlockSpec((tile_r, K + 1), lambda i: (i, 0)),     # S_aug
                pl.BlockSpec((K, F), lambda i: (0, 0)),              # Z (resident)
                pl.BlockSpec((1, 1), lambda i: (0, 0)),              # ortho
            ),
            scratch_shapes=[
                pltpu.VMEM((K, K), jnp.float32),                     # S^T S acc
            ],
        ),
        compiler_params=compiler_params_1d,
    )(x, w_fused, b_fused)

    # ---------------- pass 2: adj_new, mincut --------------------------------
    adjacency_kernel = functools.partial(_adjacency_kernel, num_clusters=K)
    adjnew_out, mincut = pl.pallas_call(
        adjacency_kernel,
        out_shape=(
            jax.ShapeDtypeStruct((K, K), jnp.float32),      # adj_new
            jax.ShapeDtypeStruct((1, 1), jnp.float32),      # mincut loss
        ),
        grid_spec=pltpu.PrefetchScalarGridSpec(
            num_scalar_prefetch=0,
            grid=(nr, nc),
            in_specs=[
                pl.BlockSpec((tile_r, tile_c), lambda i, j: (i, j)),   # adj block
                pl.BlockSpec((tile_c, K + 1), lambda i, j: (j, 0)),    # S_aug cols
                pl.BlockSpec((tile_r, K), lambda i, j: (i, 0)),        # S rows (f32)
            ],
            out_specs=(
                pl.BlockSpec((K, K), lambda i, j: (0, 0)),             # adj_new (resident)
                pl.BlockSpec((1, 1), lambda i, j: (0, 0)),             # mincut loss
            ),
            scratch_shapes=[
                pltpu.VMEM((tile_r, K + 1), jnp.float32),   # per-row-tile [A@S | deg]
                pltpu.VMEM((1, 1), jnp.float32),            # cut accumulator
                pltpu.VMEM((1, 1), jnp.float32),            # vol accumulator
            ],
        ),
        compiler_params=compiler_params_2d,
    )(adj, s_aug, s_f32)

    # match the PyTorch return signature: adj_new.unsqueeze(0), scalar losses
    return z_out, adjnew_out[None], mincut[0, 0], ortho[0, 0], s_f32


if __name__ == "__main__":
    # small, TPU-friendly synthetic shapes (2 x 1 grid of 256 x 512 adj tiles)
    N = 512     # number of graph nodes
    F = 32      # in_dim (node feature dim)
    K = 30      # num_clusters (as in the reference module)

    key = jax.random.PRNGKey(0)
    k_x, k_adj, k_wa, k_ba, k_wp, k_bp = jax.random.split(key, 6)

    # node features [N, F]
    x = jax.random.normal(k_x, (N, F), dtype=jnp.float32)

    # synthetic sparse graph densified to a binary [N, N] adjacency
    # (symmetric, zero diagonal) -- stand-in for SparseTensor.from_edge_index.
    a = jax.random.bernoulli(k_adj, p=0.1, shape=(N, N)).astype(jnp.float32)
    adj_f32 = jnp.clip(a + a.T, 0.0, 1.0) * (1.0 - jnp.eye(N, dtype=jnp.float32))
    # Persistent bf16 storage of the binary adjacency (exact for {0,1}).
    # This one-time cast models graph-construction-time storage, not a per-call
    # conversion; the kernel consumes it as-is.
    adj = adj_f32.astype(jnp.bfloat16)

    # nn.Linear-equivalent params stored [in, out] so the kernel does x @ W + b
    w_assign = jax.random.normal(k_wa, (F, K), dtype=jnp.float32) * 0.1
    b_assign = jax.random.normal(k_ba, (1, K), dtype=jnp.float32) * 0.1
    w_proj = jax.random.normal(k_wp, (F, F), dtype=jnp.float32) * 0.1
    b_proj = jax.random.normal(k_bp, (1, F), dtype=jnp.float32) * 0.1

    outs = mincut_pool(x, adj, w_assign, b_assign, w_proj, b_proj,
                       tile_r=256, tile_c=1024)
    Z, adj_new, mincut_loss, ortho_loss, S = jax.block_until_ready(outs)

    # pure-JAX reference (same math as the PyTorch module), exact f32 adjacency
    def reference(x, adj, wa, ba, wp, bp):
        S = jax.nn.softmax(x @ wa + ba, axis=-1)
        x_proj = x @ wp + bp
        Z = S.T @ x_proj
        adj_S = adj @ S
        adj_new = S.T @ adj_S
        deg = adj.sum(axis=1)
        vol = jnp.trace(S.T @ (deg[:, None] * jnp.ones_like(S)))
        cut = jnp.trace(adj_new)
        mincut = -cut / (vol + 1e-9)
        SS = S.T @ S
        ortho = jnp.linalg.norm(SS - jnp.eye(S.shape[1]), ord="fro")
        return Z, adj_new[None], mincut, ortho, S

    rZ, radj, rmin, rorth, rS = reference(x, adj_f32, w_assign, b_assign,
                                          w_proj, b_proj)

    assert Z.shape == (K, F)
    assert adj_new.shape == (1, K, K)
    assert S.shape == (N, K)
    assert mincut_loss.shape == () and ortho_loss.shape == ()
    assert jnp.allclose(S, rS, rtol=2e-2, atol=2e-2)
    assert jnp.allclose(Z, rZ, rtol=2e-2, atol=2e-2)
    assert jnp.allclose(adj_new, radj, rtol=2e-2, atol=2e-2)
    assert jnp.allclose(mincut_loss, rmin, rtol=2e-2, atol=2e-2)
    assert jnp.allclose(ortho_loss, rorth, rtol=2e-2, atol=2e-2)
    print("KERNEL_OK")
</pallas_src>

<mosaic_0001>
module attributes {stable_mosaic.version = 11 : i64} {
  func.func @_assign_kernel(%arg0: i32, %arg1: memref<256x32xf32, #tpu.memory_space<vmem>>, %arg2: memref<32x62xf32, #tpu.memory_space<vmem>>, %arg3: memref<1x62xf32, #tpu.memory_space<vmem>>, %arg4: memref<256x30xf32, #tpu.memory_space<vmem>>, %arg5: memref<256x31xbf16, #tpu.memory_space<vmem>>, %arg6: memref<30x32xf32, #tpu.memory_space<vmem>>, %arg7: memref<1x1xf32, #tpu.memory_space<vmem>>, %arg8: memref<30x30xf32, #tpu.memory_space<vmem>>) attributes {dimension_semantics = [#tpu.dimension_semantics<arbitrary>], iteration_bounds = array<i64: 2>, scalar_prefetch = 0 : i64, scratch_operands = 1 : i64, tpu.core_type = #tpu.core_type<tc>, window_params = [{transform_indices = @transform_0, window_bounds = array<i64: 256, 32>}, {pipeline_mode = #tpu.pipeline_mode<synchronous>, transform_indices = @transform_1, window_bounds = array<i64: 32, 62>}, {pipeline_mode = #tpu.pipeline_mode<synchronous>, transform_indices = @transform_2, window_bounds = array<i64: 1, 62>}, {transform_indices = @transform_3, window_bounds = array<i64: 256, 30>}, {transform_indices = @transform_4, window_bounds = array<i64: 256, 31>}, {pipeline_mode = #tpu.pipeline_mode<synchronous>, transform_indices = @transform_5, window_bounds = array<i64: 30, 32>}, {pipeline_mode = #tpu.pipeline_mode<synchronous>, transform_indices = @transform_6, window_bounds = array<i64: 1, 1>}]} {
    %c0_i32 = arith.constant 0 : i32
    %0 = arith.cmpi eq, %arg0, %c0_i32 : i32
    %1 = arith.extui %0 : i1 to i32
    %c0_i32_0 = arith.constant 0 : i32
    %2 = arith.cmpi ne, %1, %c0_i32_0 : i32
    scf.if %2 {
      %cst_24 = arith.constant 0.000000e+00 : f32
      %36 = vector.broadcast %cst_24 : f32 to vector<30x32xf32>
      %c0_25 = arith.constant 0 : index
      %c0_26 = arith.constant 0 : index
      %37 = vector.load %arg6[%c0_25, %c0_26] : memref<30x32xf32, #tpu.memory_space<vmem>>, vector<30x32xf32>
      tpu.vector_store %arg6[%c0_25, %c0_26], %36 {strides = array<i32>} : memref<30x32xf32, #tpu.memory_space<vmem>>, vector<30x32xf32>,
      %cst_27 = arith.constant 0.000000e+00 : f32
      %38 = vector.broadcast %cst_27 : f32 to vector<30x30xf32>
      %c0_28 = arith.constant 0 : index
      %c0_29 = arith.constant 0 : index
      %39 = vector.load %arg8[%c0_28, %c0_29] : memref<30x30xf32, #tpu.memory_space<vmem>>, vector<30x30xf32>
      tpu.vector_store %arg8[%c0_28, %c0_29], %38 {strides = array<i32>} : memref<30x30xf32, #tpu.memory_space<vmem>>, vector<30x30xf32>,
    } else {
    }
    %c0 = arith.constant 0 : index
    %c0_1 = arith.constant 0 : index
    %3 = vector.load %arg1[%c0, %c0_1] : memref<256x32xf32, #tpu.memory_space<vmem>>, vector<256x32xf32>
    %c0_2 = arith.constant 0 : index
    %c0_3 = arith.constant 0 : index
    %4 = vector.load %arg2[%c0_2, %c0_3] : memref<32x62xf32, #tpu.memory_space<vmem>>, vector<32x62xf32>
    %cst = arith.constant dense<0.000000e+00> : vector<256x62xf32>
    %5 = tpu.matmul %3, %4, %cst {dimension_numbers = #tpu.dot_dimension_numbers<[1], [0], [0], [1], [0, 0, 1, 1], [], []>} : vector<256x32xf32>, vector<32x62xf32>, vector<256x62xf32> -> vector<256x62xf32>
    %c0_4 = arith.constant 0 : index
    %c0_5 = arith.constant 0 : index
    %6 = vector.load %arg3[%c0_4, %c0_5] : memref<1x62xf32, #tpu.memory_space<vmem>>, vector<1x62xf32>
    %7 = vector.broadcast %6 : vector<1x62xf32> to vector<256x62xf32>
    %8 = arith.addf %5, %7 : vector<256x62xf32>
    %9 = vector.extract_strided_slice %8 {offsets = [0, 0], sizes = [256, 30], strides = [1, 1]} : vector<256x62xf32> to vector<256x30xf32>
    %10 = vector.extract_strided_slice %8 {offsets = [0, 30], sizes = [256, 32], strides = [1, 1]} : vector<256x62xf32> to vector<256x32xf32>
    %cst_6 = arith.constant dense<0xFF800000> : vector<256xf32>
    %11 = vector.multi_reduction <maximumf>, %9, %cst_6 [1] : vector<256x30xf32> to vector<256xf32>
    %12 = vector.shape_cast %11 : vector<256xf32> to vector<256x1xf32>
    %13 = vector.broadcast %12 : vector<256x1xf32> to vector<256x30xf32>
    %14 = arith.subf %9, %13 : vector<256x30xf32>
    %15 = math.exp %14 : vector<256x30xf32>
    %cst_7 = arith.constant dense<0.000000e+00> : vector<256xf32>
    %16 = vector.multi_reduction <add>, %15, %cst_7 [1] : vector<256x30xf32> to vector<256xf32>
    %17 = vector.shape_cast %16 : vector<256xf32> to vector<256x1xf32>
    %18 = vector.broadcast %17 : vector<256x1xf32> to vector<256x30xf32>
    %19 = arith.divf %15, %18 : vector<256x30xf32>
    %c0_8 = arith.constant 0 : index
    %c0_9 = arith.constant 0 : index
    %20 = vector.load %arg4[%c0_8, %c0_9] : memref<256x30xf32, #tpu.memory_space<vmem>>, vector<256x30xf32>
    tpu.vector_store %arg4[%c0_8, %c0_9], %19 {strides = array<i32>} : memref<256x30xf32, #tpu.memory_space<vmem>>, vector<256x30xf32>,
    %cst_10 = arith.constant 1.000000e+00 : f32
    %21 = vector.broadcast %cst_10 : f32 to vector<256x1xf32>
    %22 = tpu.concatenate %19, %21 in 1 : vector<256x30xf32>, vector<256x1xf32> -> vector<256x31xf32>
    %23 = arith.truncf %22 : vector<256x31xf32> to vector<256x31xbf16>
    %c0_11 = arith.constant 0 : index
    %c0_12 = arith.constant 0 : index
    %24 = vector.load %arg5[%c0_11, %c0_12] : memref<256x31xbf16, #tpu.memory_space<vmem>>, vector<256x31xbf16>
    tpu.vector_store %arg5[%c0_11, %c0_12], %23 {strides = array<i32>} : memref<256x31xbf16, #tpu.memory_space<vmem>>, vector<256x31xbf16>,
    %c0_13 = arith.constant 0 : index
    %c0_14 = arith.constant 0 : index
    %25 = vector.load %arg6[%c0_13, %c0_14] : memref<30x32xf32, #tpu.memory_space<vmem>>, vector<30x32xf32>
    %cst_15 = arith.constant dense<0.000000e+00> : vector<30x32xf32>
    %26 = tpu.matmul %19, %10, %cst_15 {dimension_numbers = #tpu.dot_dimension_numbers<[0], [0], [1], [1], [0, 1, 1, 1], [], []>} : vector<256x30xf32>, vector<256x32xf32>, vector<30x32xf32> -> vector<30x32xf32>
    %27 = arith.addf %25, %26 : vector<30x32xf32>
    %c0_16 = arith.constant 0 : index
    %c0_17 = arith.constant 0 : index
    %28 = vector.load %arg6[%c0_16, %c0_17] : memref<30x32xf32, #tpu.memory_space<vmem>>, vector<30x32xf32>
    tpu.vector_store %arg6[%c0_16, %c0_17], %27 {strides = array<i32>} : memref<30x32xf32, #tpu.memory_space<vmem>>, vector<30x32xf32>,
    %c0_18 = arith.constant 0 : index
    %c0_19 = arith.constant 0 : index
    %29 = vector.load %arg8[%c0_18, %c0_19] : memref<30x30xf32, #tpu.memory_space<vmem>>, vector<30x30xf32>
    %cst_20 = arith.constant dense<0.000000e+00> : vector<30x30xf32>
    %30 = tpu.matmul %19, %19, %cst_20 {dimension_numbers = #tpu.dot_dimension_numbers<[0], [0], [1], [1], [0, 1, 1, 1], [], []>} : vector<256x30xf32>, vector<256x30xf32>, vector<30x30xf32> -> vector<30x30xf32>
    %31 = arith.addf %29, %30 : vector<30x30xf32>
    %c0_21 = arith.constant 0 : index
    %c0_22 = arith.constant 0 : index
    %32 = vector.load %arg8[%c0_21, %c0_22] : memref<30x30xf32, #tpu.memory_space<vmem>>, vector<30x30xf32>
    tpu.vector_store %arg8[%c0_21, %c0_22], %31 {strides = array<i32>} : memref<30x30xf32, #tpu.memory_space<vmem>>, vector<30x30xf32>,
    %c1_i32 = arith.constant 1 : i32
    %33 = arith.cmpi eq, %arg0, %c1_i32 : i32
    %34 = arith.extui %33 : i1 to i32
    %c0_i32_23 = arith.constant 0 : i32
    %35 = arith.cmpi ne, %34, %c0_i32_23 : i32
    scf.if %35 {
      %c0_24 = arith.constant 0 : index
      %c0_25 = arith.constant 0 : index
      %36 = vector.load %arg8[%c0_24, %c0_25] : memref<30x30xf32, #tpu.memory_space<vmem>>, vector<30x30xf32>
      %37 = tpu.iota {dimensions = array<i32: 0>} : vector<30x30xi32>
      %38 = tpu.iota {dimensions = array<i32: 1>} : vector<30x30xi32>
      %39 = arith.cmpi eq, %37, %38 : vector<30x30xi32>
      %40 = arith.extui %39 : vector<30x30xi1> to vector<30x30xi32>
      %41 = arith.sitofp %40 : vector<30x30xi32> to vector<30x30xf32>
      %42 = arith.subf %36, %41 : vector<30x30xf32>
      %43 = arith.mulf %42, %42 : vector<30x30xf32>
      %44 = vector.shape_cast %43 : vector<30x30xf32> to vector<1x30x30xf32>
      %cst_26 = arith.constant dense<0.000000e+00> : vector<1xf32>
      %45 = vector.multi_reduction <add>, %44, %cst_26 [1, 2] : vector<1x30x30xf32> to vector<1xf32>
      %46 = vector.shape_cast %45 : vector<1xf32> to vector<1x1x1xf32>
      %47 = vector.extract %46[0, 0, 0] : f32 from vector<1x1x1xf32>
      %48 = math.sqrt %47 : f32
      %49 = vector.broadcast %48 : f32 to vector<1x1xf32>
      %c0_27 = arith.constant 0 : index
      %c0_28 = arith.constant 0 : index
      %50 = vector.load %arg7[%c0_27, %c0_28] : memref<1x1xf32, #tpu.memory_space<vmem>>, vector<1x1xf32>
      tpu.vector_store %arg7[%c0_27, %c0_28], %49 {strides = array<i32>} : memref<1x1xf32, #tpu.memory_space<vmem>>, vector<1x1xf32>,
    } else {
    }
    return
  }
  func.func @transform_0(%arg0: i32) -> (i32, i32) {
    %c0_i32 = arith.constant 0 : i32
    %c0_i32_0 = arith.constant 0 : i32
    return %arg0, %c0_i32 : i32, i32
  }
  func.func @transform_1(%arg0: i32) -> (i32, i32) {
    %c0_i32 = arith.constant 0 : i32
    %c0_i32_0 = arith.constant 0 : i32
    %c0_i32_1 = arith.constant 0 : i32
    return %c0_i32, %c0_i32_0 : i32, i32
  }
  func.func @transform_2(%arg0: i32) -> (i32, i32) {
    %c0_i32 = arith.constant 0 : i32
    %c0_i32_0 = arith.constant 0 : i32
    %c0_i32_1 = arith.constant 0 : i32
    return %c0_i32, %c0_i32_0 : i32, i32
  }
  func.func @transform_3(%arg0: i32) -> (i32, i32) {
    %c0_i32 = arith.constant 0 : i32
    %c0_i32_0 = arith.constant 0 : i32
    return %arg0, %c0_i32 : i32, i32
  }
  func.func @transform_4(%arg0: i32) -> (i32, i32) {
    %c0_i32 = arith.constant 0 : i32
    %c0_i32_0 = arith.constant 0 : i32
    return %arg0, %c0_i32 : i32, i32
  }
  func.func @transform_5(%arg0: i32) -> (i32, i32) {
    %c0_i32 = arith.constant 0 : i32
    %c0_i32_0 = arith.constant 0 : i32
    %c0_i32_1 = arith.constant 0 : i32
    return %c0_i32, %c0_i32_0 : i32, i32
  }
  func.func @transform_6(%arg0: i32) -> (i32, i32) {
    %c0_i32 = arith.constant 0 : i32
    %c0_i32_0 = arith.constant 0 : i32
    %c0_i32_1 = arith.constant 0 : i32
    return %c0_i32, %c0_i32_0 : i32, i32
  }
}

</mosaic_0001>

<llo_original>
// kernel: tpu_custom_call.1
$region0: #{tpu_custom_call.1}
  #allocation0 [shape = 'u32[]', space=smem, size = 0x4, offset = 0x4, fixed_abs, tag = 'smem constant byte address 0x4 - core index']
  #allocation1 [shape = 'u32[144,128]{1,0:T(1,128)}', space=vmem, size = 0x12000, scoped, tag = 'internal scratch']
  #allocation2 [shape = 'f32[30,30]{1,0:T(8,128)}', space=vmem, size = 0x4000, scoped, tag = 'scratch operand']
  %s0 = inlined_call_operand.vmem [shape: f32[512,32], index: 0, kind: input, shape index: {}]
  %s1 = inlined_call_operand.vmem [shape: f32[32,62], index: 1, kind: input, shape index: {}]
  %s2 = inlined_call_operand.vmem [shape: f32[1,62], index: 2, kind: input, shape index: {}]
  %s3 = inlined_call_operand.vmem [shape: f32[512,30], index: 3, kind: output, shape index: {0}]
  %s4 = inlined_call_operand.vmem [shape: bf16[512,31], index: 4, kind: output, shape index: {1}]
  %s5 = inlined_call_operand.hbm [shape: f32[30,32], index: 5, kind: output, shape index: {2}]
  %s6 = inlined_call_operand.hbm [shape: f32[1,1], index: 6, kind: output, shape index: {3}]
  %7 = xla_tuple %s3, %s4, %s5, %s6
  %s8 = sld [smem:[#allocation0]]
  $region77: #{tpu_custom_call.1} parent=0
    _
  %s10 = ssub.s32 1, %s8
  %s11 = scalar_select 0, %s10, %s8
  $region1: #{tpu_custom_call.1} parent=0
    #allocation3 [shape = 'u8[16384]{0}', space=vmem, size = 0x4000, scoped, tag = 'output window, operand 2, single buffered']
    #allocation4 [shape = 's32[2]{0}', space=sflag, size = 0x8, scoped, tag = 'scoped memory for tpu_custom_call.1']
    #allocation5 [shape = 'u8[512]{0}', space=vmem, size = 0x400, scoped, tag = 'output window, operand 3, single buffered']
    #allocation6 [shape = 's32[1]{0}', space=sflag, size = 0x4, scoped, tag = 'scoped memory for tpu_custom_call.1']
    %12 = vsyncpa [#allocation4], 0
    %13 = vsyncpa [#allocation6], 0
    loop: start=0, step=1, limit=4
    $region2: #{tpu_custom_call.1} parent=1 // loop_pre_header
      _
    $region3: #{tpu_custom_call.1} parent=1 // loop_header
      %s15 = sphi 0, %s19
      %p16 = scmp.ge.s32.totalorder %s15, 4
      %s25 = sphi 0, %s27
      %s28 = sphi 0, %s25
      %s29 = sphi 0, %s28
      %s45 = sphi 0, %s29
      %s49 = sphi 0, %s49
      %s51 = sphi 0, %s49
      %s52 = sphi 0, %s51
      %s66 = sphi 0, %s52
      %s70 = sphi 0, %s70
      %s72 = sphi 0, %s70
      %s73 = sphi 0, %s72
      %s87 = sphi 0, %s73
      %s93 = sphi 0, %s95
      %s96 = sphi 0, %s93
      %s97 = sphi 0, %s96
      %s113 = sphi 0, %s97
      %s119 = sphi 0, %s121
      %s122 = sphi 0, %s119
      %s123 = sphi 0, %s122
      %s139 = sphi 0, %s123
      %s143 = sphi 0, %s143
      %s145 = sphi 0, %s143
      %s146 = sphi 0, %s145
      %s160 = sphi 0, %s146
      %s164 = sphi 0, %s164
      %s166 = sphi 0, %s164
      %s167 = sphi 0, %s166
      %s181 = sphi 0, %s167
    $region4: #{tpu_custom_call.1} parent=1 // loop_header_branch
      %18 = sbr.rel (%p16) target = $region8
    $region5: #{tpu_custom_call.1} parent=1 // loop_body
      %s20 = ssub.s32 %s15, 1
      %s21 = ssub.s32 %s15, 2
      %s22 = sadd.s32 %s15, 1
      %s23 = ssub.s32 %s15, %s22
      %p24 = scmp.eq.s32.totalorder %s23, 0
      %s26 = sadd.s32 %s25, 1
      %s27 = scalar_select %p24, %s25, %s26
      %p30 = pneg %p24
      %p31 = scmp.eq.s32.totalorder %s15, 1
      %p32 = por %p30, %p31
      %p33 = scmp.ne.s32.totalorder %s25, %s28
      %p34 = scmp.eq.s32.totalorder %s15, 0
      %p35 = por %p33, %p34
      %p36 = scmp.ne.s32.totalorder %s25, %s28
      %p37 = scmp.eq.s32.totalorder %s20, 1
      %p38 = por %p36, %p37
      %p39 = scmp.ne.s32.totalorder %s28, %s29
      %p40 = scmp.eq.s32.totalorder %s20, 0
      %p41 = por %p39, %p40
      %p42 = scmp.ne.s32.totalorder %s28, %s29
      %p43 = scmp.eq.s32.totalorder %s21, 1
      %p44 = por %p42, %p43
      %p46 = scmp.ne.s32.totalorder %s29, %s45
      %p47 = scmp.eq.s32.totalorder %s21, 0
      %p48 = por %p46, %p47
      %s50 = sadd.s32 %s49, 1
      %p53 = scmp.eq.s32.totalorder %s15, 1
      %p54 = scmp.ne.s32.totalorder %s49, %s51
      %p55 = scmp.eq.s32.totalorder %s15, 0
      %p56 = por %p54, %p55
      %p57 = scmp.ne.s32.totalorder %s49, %s51
      %p58 = scmp.eq.s32.totalorder %s20, 1
      %p59 = por %p57, %p58
      %p60 = scmp.ne.s32.totalorder %s51, %s52
      %p61 = scmp.eq.s32.totalorder %s20, 0
      %p62 = por %p60, %p61
      %p63 = scmp.ne.s32.totalorder %s51, %s52
      %p64 = scmp.eq.s32.totalorder %s21, 1
      %p65 = por %p63, %p64
      %p67 = scmp.ne.s32.totalorder %s52, %s66
      %p68 = scmp.eq.s32.totalorder %s21, 0
      %p69 = por %p67, %p68
      %s71 = sadd.s32 %s70, 1
      %p74 = scmp.eq.s32.totalorder %s15, 1
      %p75 = scmp.ne.s32.totalorder %s70, %s72
      %p76 = scmp.eq.s32.totalorder %s15, 0
      %p77 = por %p75, %p76
      %p78 = scmp.ne.s32.totalorder %s70, %s72
      %p79 = scmp.eq.s32.totalorder %s20, 1
      %p80 = por %p78, %p79
      %p81 = scmp.ne.s32.totalorder %s72, %s73
      %p82 = scmp.eq.s32.totalorder %s20, 0
      %p83 = por %p81, %p82
      %p84 = scmp.ne.s32.totalorder %s72, %s73
      %p85 = scmp.eq.s32.totalorder %s21, 1
      %p86 = por %p84, %p85
      %p88 = scmp.ne.s32.totalorder %s73, %s87
      %p89 = scmp.eq.s32.totalorder %s21, 0
      %p90 = por %p88, %p89
      %s91 = ssub.s32 %s15, %s22
      %p92 = scmp.eq.s32.totalorder %s91, 0
      %s94 = sadd.s32 %s93, 1
      %s95 = scalar_select %p92, %s93, %s94
      %p98 = pneg %p92
      %p99 = scmp.eq.s32.totalorder %s15, 1
      %p100 = por %p98, %p99
      %p101 = scmp.ne.s32.totalorder %s93, %s96
      %p102 = scmp.eq.s32.totalorder %s15, 0
      %p103 = por %p101, %p102
      %p104 = scmp.ne.s32.totalorder %s93, %s96
      %p105 = scmp.eq.s32.totalorder %s20, 1
      %p106 = por %p104, %p105
      %p107 = scmp.ne.s32.totalorder %s96, %s97
      %p108 = scmp.eq.s32.totalorder %s20, 0
      %p109 = por %p107, %p108
      %p110 = scmp.ne.s32.totalorder %s96, %s97
      %p111 = scmp.eq.s32.totalorder %s21, 1
      %p112 = por %p110, %p111
      %p114 = scmp.ne.s32.totalorder %s97, %s113
      %p115 = scmp.eq.s32.totalorder %s21, 0
      %p116 = por %p114, %p115
      %s117 = ssub.s32 %s15, %s22
      %p118 = scmp.eq.s32.totalorder %s117, 0
      %s120 = sadd.s32 %s119, 1
      %s121 = scalar_select %p118, %s119, %s120
      %p124 = pneg %p118
      %p125 = scmp.eq.s32.totalorder %s15, 1
      %p126 = por %p124, %p125
      %p127 = scmp.ne.s32.totalorder %s119, %s122
      %p128 = scmp.eq.s32.totalorder %s15, 0
      %p129 = por %p127, %p128
      %p130 = scmp.ne.s32.totalorder %s119, %s122
      %p131 = scmp.eq.s32.totalorder %s20, 1
      %p132 = por %p130, %p131
      %p133 = scmp.ne.s32.totalorder %s122, %s123
      %p134 = scmp.eq.s32.totalorder %s20, 0
      %p135 = por %p133, %p134
      %p136 = scmp.ne.s32.totalorder %s122, %s123
      %p137 = scmp.eq.s32.totalorder %s21, 1
      %p138 = por %p136, %p137
      %p140 = scmp.ne.s32.totalorder %s123, %s139
      %p141 = scmp.eq.s32.totalorder %s21, 0
      %p142 = por %p140, %p141
      %s144 = sadd.s32 %s143, 1
      %p147 = scmp.eq.s32.totalorder %s15, 1
      %p148 = scmp.ne.s32.totalorder %s143, %s145
      %p149 = scmp.eq.s32.totalorder %s15, 0
      %p150 = por %p148, %p149
      %p151 = scmp.ne.s32.totalorder %s143, %s145
      %p152 = scmp.eq.s32.totalorder %s20, 1
      %p153 = por %p151, %p152
      %p154 = scmp.ne.s32.totalorder %s145, %s146
      %p155 = scmp.eq.s32.totalorder %s20, 0
      %p156 = por %p154, %p155
      %p157 = scmp.ne.s32.totalorder %s145, %s146
      %p158 = scmp.eq.s32.totalorder %s21, 1
      %p159 = por %p157, %p158
      %p161 = scmp.ne.s32.totalorder %s146, %s160
      %p162 = scmp.eq.s32.totalorder %s21, 0
      %p163 = por %p161, %p162
      %s165 = sadd.s32 %s164, 1
      %p168 = scmp.eq.s32.totalorder %s15, 1
      %p169 = scmp.ne.s32.totalorder %s164, %s166
      %p170 = scmp.eq.s32.totalorder %s15, 0
      %p171 = por %p169, %p170
      %p172 = scmp.ne.s32.totalorder %s164, %s166
      %p173 = scmp.eq.s32.totalorder %s20, 1
      %p174 = por %p172, %p173
      %p175 = scmp.ne.s32.totalorder %s166, %s167
      %p176 = scmp.eq.s32.totalorder %s20, 0
      %p177 = por %p175, %p176
      %p178 = scmp.ne.s32.totalorder %s166, %s167
      %p179 = scmp.eq.s32.totalorder %s21, 1
      %p180 = por %p178, %p179
      %p182 = scmp.ne.s32.totalorder %s167, %s181
      %p183 = scmp.eq.s32.totalorder %s21, 0
      %p184 = por %p182, %p183
      %p185 = scmp.le.s32.totalorder 1, %s15
      %p186 = scmp.lt.s32.totalorder %s15, 3
      %p187 = pnand %p185, %p186
      %p188 = pneg %p187
      // Predicated region
      $region9: #{tpu_custom_call.1} parent=5 // pred_check
        _
      $region10: #{tpu_custom_call.1} parent=5 // pred_check_branch
        %190 = sbr.rel (%p187) target = $region12
      $region11: #{tpu_custom_call.1} parent=5 // pred_region
        %s191 = ssub.s32 %s15, 1
        // Predicated region
        $region13: #{tpu_custom_call.1} parent=11 // pred_check
          %p192 = pneg %p62
        $region14: #{tpu_custom_call.1} parent=11 // pred_check_branch
          %194 = sbr.rel (%p192) target = $region16
        $region15: #{tpu_custom_call.1} parent=11 // pred_region
          _
        $region16: #{tpu_custom_call.1} parent=11 // pred_fallthru
          _
        // Predicated region
        $region17: #{tpu_custom_call.1} parent=11 // pred_check
          %p195 = pneg %p83
        $region18: #{tpu_custom_call.1} parent=11 // pred_check_branch
          %197 = sbr.rel (%p195) target = $region20
        $region19: #{tpu_custom_call.1} parent=11 // pred_region
          _
        $region20: #{tpu_custom_call.1} parent=11 // pred_fallthru
          _
      $region12: #{tpu_custom_call.1} parent=5 // pred_fallthru
        _
      %p198 = scmp.lt.s32.totalorder %s15, 2
      // Predicated region
      $region21: #{tpu_custom_call.1} parent=5 // pred_check
        %p199 = pneg %p198
      $region22: #{tpu_custom_call.1} parent=5 // pred_check_branch
        %201 = sbr.rel (%p199) target = $region24
      $region23: #{tpu_custom_call.1} parent=5 // pred_region
        // Predicated region
        $region25: #{tpu_custom_call.1} parent=23 // pred_check
          %p202 = pneg %p35
        $region26: #{tpu_custom_call.1} parent=23 // pred_check_branch
          %204 = sbr.rel (%p202) target = $region28
        $region27: #{tpu_custom_call.1} parent=23 // pred_region
          %s205 = smul.u32 32, %s15
          %p206 = scmp.lt.s32.totalorder %s205, 63
          %s207 = scalar_select %p206, %s205, 63
          %s208 = smul.addr %s207, 8
          %s209 = scalar_lea.vmem %s0, %s208
          %s210 = smul.u32 32, %s15
        $region28: #{tpu_custom_call.1} parent=23 // pred_fallthru
          _
      $region24: #{tpu_custom_call.1} parent=5 // pred_fallthru
        _
      %p211 = scmp.le.s32.totalorder 1, %s15
      %p212 = scmp.lt.s32.totalorder %s15, 3
      %p213 = pnand %p211, %p212
      %p214 = pneg %p213
      // Predicated region
      $region29: #{tpu_custom_call.1} parent=5 // pred_check
        _
      $region30: #{tpu_custom_call.1} parent=5 // pred_check_branch
        %216 = sbr.rel (%p213) target = $region32
      $region31: #{tpu_custom_call.1} parent=5 // pred_region
        %s217 = ssub.s32 %s15, 1
        %s218 = smul.u32 32, %s20
        %p219 = scmp.lt.s32.totalorder %s218, 63
        %s220 = scalar_select %p219, %s218, 63
        %s221 = smul.addr %s220, 8
        %s222 = scalar_lea.vmem %s0, %s221
        %p223 = pneg %p41
        %p224 = pneg %p38
        %p225 = pneg %p62
        %p226 = pneg %p59
        %p227 = pneg %p83
        %p228 = pneg %p80
        %p229 = pneg %p109
        %p230 = pneg %p106
        %s231 = smul.u32 32, %s20
        %p232 = scmp.lt.s32.totalorder %s231, 63
        %s233 = scalar_select %p232, %s231, 63
        %s234 = smul.addr %s233, 8
        %s235 = scalar_lea.vmem %s3, %s234
        %p236 = pneg %p135
        %p237 = pneg %p132
        %s238 = smul.u32 32, %s20
        %p239 = scmp.lt.s32.totalorder %s238, 63
        %s240 = scalar_select %p239, %s238, 63
        %s241 = smul.addr %s240, 4
        %s242 = scalar_lea.vmem %s4, %s241
        %p243 = pneg %p156
        %p244 = pneg %p153
        %p245 = pneg %p177
        %p246 = pneg %p174
        %s247 = smul.u32 32, %s20
        %p248 = scmp.lt.s32.totalorder %s247, 63
        %s249 = scalar_select %p248, %s247, 63
        %s250 = smul.addr %s249, 8
        %s251 = scalar_lea.vmem %s0, %s250
        %s252 = smul.u32 32, %s20
        %s253 = smul.u32 32, %s20
        %p254 = scmp.lt.s32.totalorder %s253, 63
        %s255 = scalar_select %p254, %s253, 63
        %s256 = smul.addr %s255, 8
        %s257 = scalar_lea.vmem %s3, %s256
        %s258 = smul.u32 32, %s20
        %s259 = smul.u32 32, %s20
        %p260 = scmp.lt.s32.totalorder %s259, 63
        %s261 = scalar_select %p260, %s259, 63
        %s262 = smul.addr %s261, 4
        %s263 = scalar_lea.vmem %s4, %s262
        %s264 = smul.u32 32, %s20
        %p265 = scmp.eq.s32.totalorder %s20, 0
        // Predicated region
        $region33: #{tpu_custom_call.1} parent=31 // pred_check
          %p266 = pneg %p265
        $region34: #{tpu_custom_call.1} parent=31 // pred_check_branch
          %268 = sbr.rel (%p266) target = $region36
        $region35: #{tpu_custom_call.1} parent=31 // pred_region
          %vm269 = vcmask 261120
          %270 = vst.msk [vmem:[#allocation3] sm:$0xff] %vm269, 0.0
          %271 = vst.msk [vmem:[#allocation3 + $0x8] sm:$0xff] %vm269, 0.0
          %272 = vst.msk [vmem:[#allocation3 + $0x10] sm:$0xff] %vm269, 0.0
          %vm273 = vcmask 259072
          %274 = vst.msk [vmem:[#allocation3 + $0x18] sm:$0x3f] %vm273, 0.0
          %vm275 = vcmask 244736
          %276 = vst.msk [vmem:[#allocation2] sm:$0xff] %vm275, 0.0
          %277 = vst.msk [vmem:[#allocation2 + $0x8] sm:$0xff] %vm275, 0.0
          %278 = vst.msk [vmem:[#allocation2 + $0x10] sm:$0xff] %vm275, 0.0
          %vm279 = vcmask 242688
          %280 = vst.msk [vmem:[#allocation2 + $0x18] sm:$0x3f] %vm279, 0.0
        $region36: #{tpu_custom_call.1} parent=31 // pred_fallthru
          _
        %v281 = vld [vmem:[%s251] sm:$0xff]
        %v282 = vld [vmem:[%s251 + $0x8] sm:$0xff]
        %v283 = vld [vmem:[%s251 + $0x10] sm:$0xff]
        %v284 = vld [vmem:[%s251 + $0x18] sm:$0xff]
        %v285 = vld [vmem:[%s251 + $0x20] sm:$0xff]
        %v286 = vld [vmem:[%s251 + $0x28] sm:$0xff]
        %v287 = vld [vmem:[%s251 + $0x30] sm:$0xff]
        %v288 = vld [vmem:[%s251 + $0x38] sm:$0xff]
        %v289 = vld [vmem:[%s251 + $0x40] sm:$0xff]
        %v290 = vld [vmem:[%s251 + $0x48] sm:$0xff]
        %v291 = vld [vmem:[%s251 + $0x50] sm:$0xff]
        %v292 = vld [vmem:[%s251 + $0x58] sm:$0xff]
        %v293 = vld [vmem:[%s251 + $0x60] sm:$0xff]
        %v294 = vld [vmem:[%s251 + $0x68] sm:$0xff]
        %v295 = vld [vmem:[%s251 + $0x70] sm:$0xff]
        %v296 = vld [vmem:[%s251 + $0x78] sm:$0xff]
        %v297 = vld [vmem:[%s251 + $0x80] sm:$0xff]
        %v298 = vld [vmem:[%s251 + $0x88] sm:$0xff]
        %v299 = vld [vmem:[%s251 + $0x90] sm:$0xff]
        %v300 = vld [vmem:[%s251 + $0x98] sm:$0xff]
        %v301 = vld [vmem:[%s251 + $0xa0] sm:$0xff]
        %v302 = vld [vmem:[%s251 + $0xa8] sm:$0xff]
        %v303 = vld [vmem:[%s251 + $0xb0] sm:$0xff]
        %v304 = vld [vmem:[%s251 + $0xb8] sm:$0xff]
        %v305 = vld [vmem:[%s251 + $0xc0] sm:$0xff]
        %v306 = vld [vmem:[%s251 + $0xc8] sm:$0xff]
        %v307 = vld [vmem:[%s251 + $0xd0] sm:$0xff]
        %v308 = vld [vmem:[%s251 + $0xd8] sm:$0xff]
        %v309 = vld [vmem:[%s251 + $0xe0] sm:$0xff]
        %v310 = vld [vmem:[%s251 + $0xe8] sm:$0xff]
        %v311 = vld [vmem:[%s251 + $0xf0] sm:$0xff]
        %v312 = vld [vmem:[%s251 + $0xf8] sm:$0xff]
        %v313 = vld [vmem:[%s1] sm:$0xff]
        %v314 = vld [vmem:[%s1 + $0x8] sm:$0xff]
        %v315 = vld [vmem:[%s1 + $0x10] sm:$0xff]
        %v316 = vld [vmem:[%s1 + $0x18] sm:$0xff]
        %v317 = vld [vmem:[%s2] sm:$0x1]
        %v319 = vlaneseq
        %v320 = vshrl.u32 %v319, 7
        %v321 = vsub.s32 0, %v320
        %v322 = vrot.slane %v317, %v321
        %vm324 = vcmask 261120
        %v326 = vsel %vm324, %v281, 0
        %v329 = vsel %vm324, %v282, 0
        %v332 = vsel %vm324, %v283, 0
        %v335 = vsel %vm324, %v284, 0
        %v338 = vsel %vm324, %v285, 0
        %v341 = vsel %vm324, %v286, 0
        %v344 = vsel %vm324, %v287, 0
        %v347 = vsel %vm324, %v288, 0
        %v350 = vsel %vm324, %v289, 0
        %v353 = vsel %vm324, %v290, 0
        %v356 = vsel %vm324, %v291, 0
        %v359 = vsel %vm324, %v292, 0
        %v362 = vsel %vm324, %v293, 0
        %v365 = vsel %vm324, %v294, 0
        %v368 = vsel %vm324, %v295, 0
        %v371 = vsel %vm324, %v296, 0
        %v374 = vsel %vm324, %v297, 0
        %v377 = vsel %vm324, %v298, 0
        %v380 = vsel %vm324, %v299, 0
        %v383 = vsel %vm324, %v300, 0
        %v386 = vsel %vm324, %v301, 0
        %v389 = vsel %vm324, %v302, 0
        %v392 = vsel %vm324, %v303, 0
        %v395 = vsel %vm324, %v304, 0
        %v398 = vsel %vm324, %v305, 0
        %v401 = vsel %vm324, %v306, 0
        %v404 = vsel %vm324, %v307, 0
        %v407 = vsel %vm324, %v308, 0
        %v410 = vsel %vm324, %v309, 0
        %v413 = vsel %vm324, %v310, 0
        %v416 = vsel %vm324, %v311, 0
        %v419 = vsel %vm324, %v312, 0
        %421 = vmatprep.subr.mxu0 0.0
        %422 = vmatpush1.msra.mxu0 %v313
        %423 = vmatprep.subr.mxu0 0.0
        %424 = vmatpush1.msra.mxu0 %v314
        %425 = vmatprep.subr.mxu0 0.0
        %426 = vmatpush1.msra.mxu0 %v315
        %427 = vmatprep.subr.mxu0 0.0
        %428 = vmatpush1.msra.mxu0 %v316
        %429 = vmatprep.subr.mxu0 0.0
        %430 = vmatpush1.msra.mxu0 0.0
        %431 = vmatprep.subr.mxu0 0.0
        %432 = vmatpush1.msra.mxu0 0.0
        %433 = vmatprep.subr.mxu0 0.0
        %434 = vmatpush1.msra.mxu0 0.0
        %435 = vmatprep.subr.mxu0 0.0
        %436 = vmatpush1.msra.mxu0 0.0
        %437 = vmatprep.subr.mxu0 0.0
        %438 = vmatpush1.msra.mxu0 0.0
        %439 = vmatprep.subr.mxu0 0.0
        %440 = vmatpush1.msra.mxu0 0.0
        %441 = vmatprep.subr.mxu0 0.0
        %442 = vmatpush1.msra.mxu0 0.0
        %443 = vmatprep.subr.mxu0 0.0
        %444 = vmatpush1.msra.mxu0 0.0
        %445 = vmatprep.subr.mxu0 0.0
        %446 = vmatpush1.msra.mxu0 0.0
        %447 = vmatprep.subr.mxu0 0.0
        %448 = vmatpush1.msra.mxu0 0.0
        %449 = vmatprep.subr.mxu0 0.0
        %450 = vmatpush1.msra.mxu0 0.0
        %451 = vmatprep.subr.mxu0 0.0
        %452 = vmatpush1.msra.mxu0 0.0
        %453 = vmatprep.subr.mxu0 0.0
        %454 = vmatpush1.msra.mxu0 0.0
        %455 = vmatprep.subr.mxu0 0.0
        %456 = vmatpush1.msra.mxu0 0.0
        %457 = vmatprep.subr.mxu0 0.0
        %458 = vmatpush1.msra.mxu0 0.0
        %459 = vmatprep.subr.mxu0 0.0
        %460 = vmatpush1.msra.mxu0 0.0
        %461 = vmatprep.subr.mxu0 0.0
        %462 = vmatpush1.msra.mxu0 0.0
        %463 = vmatprep.subr.mxu0 0.0
        %464 = vmatpush1.msra.mxu0 0.0
        %465 = vmatprep.subr.mxu0 0.0
        %466 = vmatpush1.msra.mxu0 0.0
        %467 = vmatprep.subr.mxu0 0.0
        %468 = vmatpush1.msra.mxu0 0.0
        %469 = vmatprep.subr.mxu0 0.0
        %470 = vmatpush1.msra.mxu0 0.0
        %471 = vmatprep.subr.mxu0 0.0
        %472 = vmatpush1.msra.mxu0 0.0
        %473 = vmatprep.subr.mxu0 0.0
        %474 = vmatpush1.msra.mxu0 0.0
        %475 = vmatprep.subr.mxu0 0.0
        %476 = vmatpush1.msra.mxu0 0.0
        %477 = vmatprep.subr.mxu0 0.0
        %478 = vmatpush1.msra.mxu0 0.0
        %479 = vmatprep.subr.mxu0 0.0
        %480 = vmatpush1.msra.mxu0 0.0
        %481 = vmatprep.subr.mxu0 0.0
        %482 = vmatpush1.msra.mxu0 0.0
        %483 = vmatprep.subr.mxu0 0.0
        %484 = vmatpush1.msra.mxu0 0.0
        %485 = vmatprep.mubr.f32.mxu0 0.0
        %486 = vmatmul.mubr.f32.gmra.mrb[0].mxu0 %v326
        %v487 = vpop.f32.mrb[0].mxu0
        %v488 = vadd.f32 %v322, %v487
        %v489 = vpop.f32.mrb[0].mxu0
        %490 = vmatprep.mubr.f32.mxu0 0.0
        %491 = vmatmul.mubr.f32.gmra.mrb[0].mxu0 %v329
        %v492 = vpop.f32.mrb[0].mxu0
        %v493 = vadd.f32 %v322, %v492
        %v494 = vpop.f32.mrb[0].mxu0
        %495 = vmatprep.mubr.f32.mxu0 0.0
        %496 = vmatmul.mubr.f32.gmra.mrb[0].mxu0 %v332
        %v497 = vpop.f32.mrb[0].mxu0
        %v498 = vadd.f32 %v322, %v497
        %v499 = vpop.f32.mrb[0].mxu0
        %500 = vmatprep.mubr.f32.mxu0 0.0
        %501 = vmatmul.mubr.f32.gmra.mrb[0].mxu0 %v335
        %v502 = vpop.f32.mrb[0].mxu0
        %v503 = vadd.f32 %v322, %v502
        %v504 = vpop.f32.mrb[0].mxu0
        %505 = vmatprep.mubr.f32.mxu0 0.0
        %506 = vmatmul.mubr.f32.gmra.mrb[0].mxu0 %v338
        %v507 = vpop.f32.mrb[0].mxu0
        %v508 = vadd.f32 %v322, %v507
        %v509 = vpop.f32.mrb[0].mxu0
        %510 = vmatprep.mubr.f32.mxu0 0.0
        %511 = vmatmul.mubr.f32.gmra.mrb[0].mxu0 %v341
        %v512 = vpop.f32.mrb[0].mxu0
        %v513 = vadd.f32 %v322, %v512
        %v514 = vpop.f32.mrb[0].mxu0
        %515 = vmatprep.mubr.f32.mxu0 0.0
        %516 = vmatmul.mubr.f32.gmra.mrb[0].mxu0 %v344
        %v517 = vpop.f32.mrb[0].mxu0
        %v518 = vadd.f32 %v322, %v517
        %v519 = vpop.f32.mrb[0].mxu0
        %520 = vmatprep.mubr.f32.mxu0 0.0
        %521 = vmatmul.mubr.f32.gmra.mrb[0].mxu0 %v347
        %v522 = vpop.f32.mrb[0].mxu0
        %v523 = vadd.f32 %v322, %v522
        %v524 = vpop.f32.mrb[0].mxu0
        %525 = vmatprep.mubr.f32.mxu0 0.0
        %526 = vmatmul.mubr.f32.gmra.mrb[0].mxu0 %v350
        %v527 = vpop.f32.mrb[0].mxu0
        %v528 = vadd.f32 %v322, %v527
        %v529 = vpop.f32.mrb[0].mxu0
        %530 = vmatprep.mubr.f32.mxu0 0.0
        %531 = vmatmul.mubr.f32.gmra.mrb[0].mxu0 %v353
        %v532 = vpop.f32.mrb[0].mxu0
        %v533 = vadd.f32 %v322, %v532
        %v534 = vpop.f32.mrb[0].mxu0
        %535 = vmatprep.mubr.f32.mxu0 0.0
        %536 = vmatmul.mubr.f32.gmra.mrb[0].mxu0 %v356
        %v537 = vpop.f32.mrb[0].mxu0
        %v538 = vadd.f32 %v322, %v537
        %v539 = vpop.f32.mrb[0].mxu0
        %540 = vmatprep.mubr.f32.mxu0 0.0
        %541 = vmatmul.mubr.f32.gmra.mrb[0].mxu0 %v359
        %v542 = vpop.f32.mrb[0].mxu0
        %v543 = vadd.f32 %v322, %v542
        %v544 = vpop.f32.mrb[0].mxu0
        %545 = vmatprep.mubr.f32.mxu0 0.0
        %546 = vmatmul.mubr.f32.gmra.mrb[0].mxu0 %v362
        %v547 = vpop.f32.mrb[0].mxu0
        %v548 = vadd.f32 %v322, %v547
        %v549 = vpop.f32.mrb[0].mxu0
        %550 = vmatprep.mubr.f32.mxu0 0.0
        %551 = vmatmul.mubr.f32.gmra.mrb[0].mxu0 %v365
        %v552 = vpop.f32.mrb[0].mxu0
        %v553 = vadd.f32 %v322, %v552
        %v554 = vpop.f32.mrb[0].mxu0
        %555 = vmatprep.mubr.f32.mxu0 0.0
        %556 = vmatmul.mubr.f32.gmra.mrb[0].mxu0 %v368
        %v557 = vpop.f32.mrb[0].mxu0
        %v558 = vadd.f32 %v322, %v557
        %v559 = vpop.f32.mrb[0].mxu0
        %560 = vmatprep.mubr.f32.mxu0 0.0
        %561 = vmatmul.mubr.f32.gmra.mrb[0].mxu0 %v371
        %v562 = vpop.f32.mrb[0].mxu0
        %v563 = vadd.f32 %v322, %v562
        %v564 = vpop.f32.mrb[0].mxu0
        %565 = vmatprep.mubr.f32.mxu0 0.0
        %566 = vmatmul.mubr.f32.gmra.mrb[0].mxu0 %v374
        %v567 = vpop.f32.mrb[0].mxu0
        %v568 = vadd.f32 %v322, %v567
        %v569 = vpop.f32.mrb[0].mxu0
        %570 = vmatprep.mubr.f32.mxu0 0.0
        %571 = vmatmul.mubr.f32.gmra.mrb[0].mxu0 %v377
        %v572 = vpop.f32.mrb[0].mxu0
        %v573 = vadd.f32 %v322, %v572
        %v574 = vpop.f32.mrb[0].mxu0
        %575 = vmatprep.mubr.f32.mxu0 0.0
        %576 = vmatmul.mubr.f32.gmra.mrb[0].mxu0 %v380
        %v577 = vpop.f32.mrb[0].mxu0
        %v578 = vadd.f32 %v322, %v577
        %v579 = vpop.f32.mrb[0].mxu0
        %580 = vmatprep.mubr.f32.mxu0 0.0
        %581 = vmatmul.mubr.f32.gmra.mrb[0].mxu0 %v383
        %v582 = vpop.f32.mrb[0].mxu0
        %v583 = vadd.f32 %v322, %v582
        %v584 = vpop.f32.mrb[0].mxu0
        %585 = vmatprep.mubr.f32.mxu0 0.0
        %586 = vmatmul.mubr.f32.gmra.mrb[0].mxu0 %v386
        %v587 = vpop.f32.mrb[0].mxu0
        %v588 = vadd.f32 %v322, %v587
        %v589 = vpop.f32.mrb[0].mxu0
        %590 = vmatprep.mubr.f32.mxu0 0.0
        %591 = vmatmul.mubr.f32.gmra.mrb[0].mxu0 %v389
        %v592 = vpop.f32.mrb[0].mxu0
        %v593 = vadd.f32 %v322, %v592
        %v594 = vpop.f32.mrb[0].mxu0
        %595 = vmatprep.mubr.f32.mxu0 0.0
        %596 = vmatmul.mubr.f32.gmra.mrb[0].mxu0 %v392
        %v597 = vpop.f32.mrb[0].mxu0
        %v598 = vadd.f32 %v322, %v597
        %v599 = vpop.f32.mrb[0].mxu0
        %600 = vmatprep.mubr.f32.mxu0 0.0
        %601 = vmatmul.mubr.f32.gmra.mrb[0].mxu0 %v395
        %v602 = vpop.f32.mrb[0].mxu0
        %v603 = vadd.f32 %v322, %v602
        %v604 = vpop.f32.mrb[0].mxu0
        %605 = vmatprep.mubr.f32.mxu0 0.0
        %606 = vmatmul.mubr.f32.gmra.mrb[0].mxu0 %v398
        %v607 = vpop.f32.mrb[0].mxu0
        %v608 = vadd.f32 %v322, %v607
        %v609 = vpop.f32.mrb[0].mxu0
        %610 = vmatprep.mubr.f32.mxu0 0.0
        %611 = vmatmul.mubr.f32.gmra.mrb[0].mxu0 %v401
        %v612 = vpop.f32.mrb[0].mxu0
        %v613 = vadd.f32 %v322, %v612
        %v614 = vpop.f32.mrb[0].mxu0
        %615 = vmatprep.mubr.f32.mxu0 0.0
        %616 = vmatmul.mubr.f32.gmra.mrb[0].mxu0 %v404
        %v617 = vpop.f32.mrb[0].mxu0
        %v618 = vadd.f32 %v322, %v617
        %v619 = vpop.f32.mrb[0].mxu0
        %620 = vmatprep.mubr.f32.mxu0 0.0
        %621 = vmatmul.mubr.f32.gmra.mrb[0].mxu0 %v407
        %v622 = vpop.f32.mrb[0].mxu0
        %v623 = vadd.f32 %v322, %v622
        %v624 = vpop.f32.mrb[0].mxu0
        %625 = vmatprep.mubr.f32.mxu0 0.0
        %626 = vmatmul.mubr.f32.gmra.mrb[0].mxu0 %v410
        %v627 = vpop.f32.mrb[0].mxu0
        %v628 = vadd.f32 %v322, %v627
        %v629 = vpop.f32.mrb[0].mxu0
        %630 = vmatprep.mubr.f32.mxu0 0.0
        %631 = vmatmul.mubr.f32.gmra.mrb[0].mxu0 %v413
        %v632 = vpop.f32.mrb[0].mxu0
        %v633 = vadd.f32 %v322, %v632
        %v634 = vpop.f32.mrb[0].mxu0
        %635 = vmatprep.mubr.f32.mxu0 0.0
        %636 = vmatmul.mubr.f32.gmra.mrb[0].mxu0 %v416
        %v637 = vpop.f32.mrb[0].mxu0
        %v638 = vadd.f32 %v322, %v637
        %v639 = vpop.f32.mrb[0].mxu0
        %640 = vmatprep.mubr.f32.mxu0 0.0
        %641 = vmatmul.mubr.f32.gmra.mrb[0].mxu0 %v419
        %v642 = vpop.f32.mrb[0].mxu0
        %v643 = vadd.f32 %v322, %v642
        %v644 = vpop.f32.mrb[0].mxu0
        %645 = vdwg.mxu0
        %vm646 = vcmask 244736
        %v647 = vsel %vm646, %v488, -inf
        %648 = vmax.xlane.f32.xlu0 %v647
        %v649 = vpop.xlane.xlu0 %648
        %v650 = vsel %vm646, %v493, -inf
        %651 = vmax.xlane.f32.xlu0 %v650
        %v652 = vpop.xlane.xlu0 %651
        %v653 = vsel %vm646, %v498, -inf
        %654 = vmax.xlane.f32.xlu0 %v653
        %v655 = vpop.xlane.xlu0 %654
        %v656 = vsel %vm646, %v503, -inf
        %657 = vmax.xlane.f32.xlu0 %v656
        %v658 = vpop.xlane.xlu0 %657
        %v659 = vsel %vm646, %v508, -inf
        %660 = vmax.xlane.f32.xlu0 %v659
        %v661 = vpop.xlane.xlu0 %660
        %v662 = vsel %vm646, %v513, -inf
        %663 = vmax.xlane.f32.xlu0 %v662
        %v664 = vpop.xlane.xlu0 %663
        %v665 = vsel %vm646, %v518, -inf
        %666 = vmax.xlane.f32.xlu0 %v665
        %v667 = vpop.xlane.xlu0 %666
        %v668 = vsel %vm646, %v523, -inf
        %669 = vmax.xlane.f32.xlu0 %v668
        %v670 = vpop.xlane.xlu0 %669
        %v671 = vsel %vm646, %v528, -inf
        %672 = vmax.xlane.f32.xlu0 %v671
        %v673 = vpop.xlane.xlu0 %672
        %v674 = vsel %vm646, %v533, -inf
        %675 = vmax.xlane.f32.xlu0 %v674
        %v676 = vpop.xlane.xlu0 %675
        %v677 = vsel %vm646, %v538, -inf
        %678 = vmax.xlane.f32.xlu0 %v677
        %v679 = vpop.xlane.xlu0 %678
        %v680 = vsel %vm646, %v543, -inf
        %681 = vmax.xlane.f32.xlu0 %v680
        %v682 = vpop.xlane.xlu0 %681
        %v683 = vsel %vm646, %v548, -inf
        %684 = vmax.xlane.f32.xlu0 %v683
        %v685 = vpop.xlane.xlu0 %684
        %v686 = vsel %vm646, %v553, -inf
        %687 = vmax.xlane.f32.xlu0 %v686
        %v688 = vpop.xlane.xlu0 %687
        %v689 = vsel %vm646, %v558, -inf
        %690 = vmax.xlane.f32.xlu0 %v689
        %v691 = vpop.xlane.xlu0 %690
        %v692 = vsel %vm646, %v563, -inf
        %693 = vmax.xlane.f32.xlu0 %v692
        %v694 = vpop.xlane.xlu0 %693
        %v695 = vsel %vm646, %v568, -inf
        %696 = vmax.xlane.f32.xlu0 %v695
        %v697 = vpop.xlane.xlu0 %696
        %v698 = vsel %vm646, %v573, -inf
        %699 = vmax.xlane.f32.xlu0 %v698
        %v700 = vpop.xlane.xlu0 %699
        %v701 = vsel %vm646, %v578, -inf
        %702 = vmax.xlane.f32.xlu0 %v701
        %v703 = vpop.xlane.xlu0 %702
        %v704 = vsel %vm646, %v583, -inf
        %705 = vmax.xlane.f32.xlu0 %v704
        %v706 = vpop.xlane.xlu0 %705
        %v707 = vsel %vm646, %v588, -inf
        %708 = vmax.xlane.f32.xlu0 %v707
        %v709 = vpop.xlane.xlu0 %708
        %v710 = vsel %vm646, %v593, -inf
        %711 = vmax.xlane.f32.xlu0 %v710
        %v712 = vpop.xlane.xlu0 %711
        %v713 = vsel %vm646, %v598, -inf
        %714 = vmax.xlane.f32.xlu0 %v713
        %v715 = vpop.xlane.xlu0 %714
        %v716 = vsel %vm646, %v603, -inf
        %717 = vmax.xlane.f32.xlu0 %v716
        %v718 = vpop.xlane.xlu0 %717
        %v719 = vsel %vm646, %v608, -inf
        %720 = vmax.xlane.f32.xlu0 %v719
        %v721 = vpop.xlane.xlu0 %720
        %v722 = vsel %vm646, %v613, -inf
        %723 = vmax.xlane.f32.xlu0 %v722
        %v724 = vpop.xlane.xlu0 %723
        %v725 = vsel %vm646, %v618, -inf
        %726 = vmax.xlane.f32.xlu0 %v725
        %v727 = vpop.xlane.xlu0 %726
        %v728 = vsel %vm646, %v623, -inf
        %729 = vmax.xlane.f32.xlu0 %v728
        %v730 = vpop.xlane.xlu0 %729
        %v731 = vsel %vm646, %v628, -inf
        %732 = vmax.xlane.f32.xlu0 %v731
        %v733 = vpop.xlane.xlu0 %732
        %v734 = vsel %vm646, %v633, -inf
        %735 = vmax.xlane.f32.xlu0 %v734
        %v736 = vpop.xlane.xlu0 %735
        %v737 = vsel %vm646, %v638, -inf
        %738 = vmax.xlane.f32.xlu0 %v737
        %v739 = vpop.xlane.xlu0 %738
        %v740 = vsel %vm646, %v643, -inf
        %741 = vmax.xlane.f32.xlu0 %v740
        %v742 = vpop.xlane.xlu0 %741
        %v743 = vsub.f32 %v488, %v649
        %v744 = vsub.f32 %v493, %v652
        %v745 = vsub.f32 %v498, %v655
        %v746 = vsub.f32 %v503, %v658
        %v747 = vsub.f32 %v508, %v661
        %v748 = vsub.f32 %v513, %v664
        %v749 = vsub.f32 %v518, %v667
        %v750 = vsub.f32 %v523, %v670
        %v751 = vsub.f32 %v528, %v673
        %v752 = vsub.f32 %v533, %v676
        %v753 = vsub.f32 %v538, %v679
        %v754 = vsub.f32 %v543, %v682
        %v755 = vsub.f32 %v548, %v685
        %v756 = vsub.f32 %v553, %v688
        %v757 = vsub.f32 %v558, %v691
        %v758 = vsub.f32 %v563, %v694
        %v759 = vsub.f32 %v568, %v697
        %v760 = vsub.f32 %v573, %v700
        %v761 = vsub.f32 %v578, %v703
        %v762 = vsub.f32 %v583, %v706
        %v763 = vsub.f32 %v588, %v709
        %v764 = vsub.f32 %v593, %v712
        %v765 = vsub.f32 %v598, %v715
        %v766 = vsub.f32 %v603, %v718
        %v767 = vsub.f32 %v608, %v721
        %v768 = vsub.f32 %v613, %v724
        %v769 = vsub.f32 %v618, %v727
        %v770 = vsub.f32 %v623, %v730
        %v771 = vsub.f32 %v628, %v733
        %v772 = vsub.f32 %v633, %v736
        %v773 = vsub.f32 %v638, %v739
        %v774 = vsub.f32 %v643, %v742
        %v775 = vmul.f32 %v743, 1.442695
        %v776 = vpow.pop %v775
        %v777 = vmul.f32 %v744, 1.442695
        %v778 = vpow.pop %v777
        %v779 = vmul.f32 %v745, 1.442695
        %v780 = vpow.pop %v779
        %v781 = vmul.f32 %v746, 1.442695
        %v782 = vpow.pop %v781
        %v783 = vmul.f32 %v747, 1.442695
        %v784 = vpow.pop %v783
        %v785 = vmul.f32 %v748, 1.442695
        %v786 = vpow.pop %v785
        %v787 = vmul.f32 %v749, 1.442695
        %v788 = vpow.pop %v787
        %v789 = vmul.f32 %v750, 1.442695
        %v790 = vpow.pop %v789
        %v791 = vmul.f32 %v751, 1.442695
        %v792 = vpow.pop %v791
        %v793 = vmul.f32 %v752, 1.442695
        %v794 = vpow.pop %v793
        %v795 = vmul.f32 %v753, 1.442695
        %v796 = vpow.pop %v795
        %v797 = vmul.f32 %v754, 1.442695
        %v798 = vpow.pop %v797
        %v799 = vmul.f32 %v755, 1.442695
        %v800 = vpow.pop %v799
        %v801 = vmul.f32 %v756, 1.442695
        %v802 = vpow.pop %v801
        %v803 = vmul.f32 %v757, 1.442695
        %v804 = vpow.pop %v803
        %v805 = vmul.f32 %v758, 1.442695
        %v806 = vpow.pop %v805
        %v807 = vmul.f32 %v759, 1.442695
        %v808 = vpow.pop %v807
        %v809 = vmul.f32 %v760, 1.442695
        %v810 = vpow.pop %v809
        %v811 = vmul.f32 %v761, 1.442695
        %v812 = vpow.pop %v811
        %v813 = vmul.f32 %v762, 1.442695
        %v814 = vpow.pop %v813
        %v815 = vmul.f32 %v763, 1.442695
        %v816 = vpow.pop %v815
        %v817 = vmul.f32 %v764, 1.442695
        %v818 = vpow.pop %v817
        %v819 = vmul.f32 %v765, 1.442695
        %v820 = vpow.pop %v819
        %v821 = vmul.f32 %v766, 1.442695
        %v822 = vpow.pop %v821
        %v823 = vmul.f32 %v767, 1.442695
        %v824 = vpow.pop %v823
        %v825 = vmul.f32 %v768, 1.442695
        %v826 = vpow.pop %v825
        %v827 = vmul.f32 %v769, 1.442695
        %v828 = vpow.pop %v827
        %v829 = vmul.f32 %v770, 1.442695
        %v830 = vpow.pop %v829
        %v831 = vmul.f32 %v771, 1.442695
        %v832 = vpow.pop %v831
        %v833 = vmul.f32 %v772, 1.442695
        %v834 = vpow.pop %v833
        %v835 = vmul.f32 %v773, 1.442695
        %v836 = vpow.pop %v835
        %v837 = vmul.f32 %v774, 1.442695
        %v838 = vpow.pop %v837
        %v839 = vsel %vm646, %v776, 0.0
        %840 = vadd.xlane.f32.xlu0 %v839
        %v841 = vpop.xlane.xlu0 %840
        %v842 = vsel %vm646, %v778, 0.0
        %843 = vadd.xlane.f32.xlu0 %v842
        %v844 = vpop.xlane.xlu0 %843
        %v845 = vsel %vm646, %v780, 0.0
        %846 = vadd.xlane.f32.xlu0 %v845
        %v847 = vpop.xlane.xlu0 %846
        %v848 = vsel %vm646, %v782, 0.0
        %849 = vadd.xlane.f32.xlu0 %v848
        %v850 = vpop.xlane.xlu0 %849
        %v851 = vsel %vm646, %v784, 0.0
        %852 = vadd.xlane.f32.xlu0 %v851
        %v853 = vpop.xlane.xlu0 %852
        %v854 = vsel %vm646, %v786, 0.0
        %855 = vadd.xlane.f32.xlu0 %v854
        %v856 = vpop.xlane.xlu0 %855
        %v857 = vsel %vm646, %v788, 0.0
        %858 = vadd.xlane.f32.xlu0 %v857
        %v859 = vpop.xlane.xlu0 %858
        %v860 = vsel %vm646, %v790, 0.0
        %861 = vadd.xlane.f32.xlu0 %v860
        %v862 = vpop.xlane.xlu0 %861
        %v863 = vsel %vm646, %v792, 0.0
        %864 = vadd.xlane.f32.xlu0 %v863
        %v865 = vpop.xlane.xlu0 %864
        %v866 = vsel %vm646, %v794, 0.0
        %867 = vadd.xlane.f32.xlu0 %v866
        %v868 = vpop.xlane.xlu0 %867
        %v869 = vsel %vm646, %v796, 0.0
        %870 = vadd.xlane.f32.xlu0 %v869
        %v871 = vpop.xlane.xlu0 %870
        %v872 = vsel %vm646, %v798, 0.0
        %873 = vadd.xlane.f32.xlu0 %v872
        %v874 = vpop.xlane.xlu0 %873
        %v875 = vsel %vm646, %v800, 0.0
        %876 = vadd.xlane.f32.xlu0 %v875
        %v877 = vpop.xlane.xlu0 %876
        %v878 = vsel %vm646, %v802, 0.0
        %879 = vadd.xlane.f32.xlu0 %v878
        %v880 = vpop.xlane.xlu0 %879
        %v881 = vsel %vm646, %v804, 0.0
        %882 = vadd.xlane.f32.xlu0 %v881
        %v883 = vpop.xlane.xlu0 %882
        %v884 = vsel %vm646, %v806, 0.0
        %885 = vadd.xlane.f32.xlu0 %v884
        %v886 = vpop.xlane.xlu0 %885
        %v887 = vsel %vm646, %v808, 0.0
        %888 = vadd.xlane.f32.xlu0 %v887
        %v889 = vpop.xlane.xlu0 %888
        %v890 = vsel %vm646, %v810, 0.0
        %891 = vadd.xlane.f32.xlu0 %v890
        %v892 = vpop.xlane.xlu0 %891
        %v893 = vsel %vm646, %v812, 0.0
        %894 = vadd.xlane.f32.xlu0 %v893
        %v895 = vpop.xlane.xlu0 %894
        %v896 = vsel %vm646, %v814, 0.0
        %897 = vadd.xlane.f32.xlu0 %v896
        %v898 = vpop.xlane.xlu0 %897
        %v899 = vsel %vm646, %v816, 0.0
        %900 = vadd.xlane.f32.xlu0 %v899
        %v901 = vpop.xlane.xlu0 %900
        %v902 = vsel %vm646, %v818, 0.0
        %903 = vadd.xlane.f32.xlu0 %v902
        %v904 = vpop.xlane.xlu0 %903
        %v905 = vsel %vm646, %v820, 0.0
        %906 = vadd.xlane.f32.xlu0 %v905
        %v907 = vpop.xlane.xlu0 %906
        %v908 = vsel %vm646, %v822, 0.0
        %909 = vadd.xlane.f32.xlu0 %v908
        %v910 = vpop.xlane.xlu0 %909
        %v911 = vsel %vm646, %v824, 0.0
        %912 = vadd.xlane.f32.xlu0 %v911
        %v913 = vpop.xlane.xlu0 %912
        %v914 = vsel %vm646, %v826, 0.0
        %915 = vadd.xlane.f32.xlu0 %v914
        %v916 = vpop.xlane.xlu0 %915
        %v917 = vsel %vm646, %v828, 0.0
        %918 = vadd.xlane.f32.xlu0 %v917
        %v919 = vpop.xlane.xlu0 %918
        %v920 = vsel %vm646, %v830, 0.0
        %921 = vadd.xlane.f32.xlu0 %v920
        %v922 = vpop.xlane.xlu0 %921
        %v923 = vsel %vm646, %v832, 0.0
        %924 = vadd.xlane.f32.xlu0 %v923
        %v925 = vpop.xlane.xlu0 %924
        %v926 = vsel %vm646, %v834, 0.0
        %927 = vadd.xlane.f32.xlu0 %v926
        %v928 = vpop.xlane.xlu0 %927
        %v929 = vsel %vm646, %v836, 0.0
        %930 = vadd.xlane.f32.xlu0 %v929
        %v931 = vpop.xlane.xlu0 %930
        %v932 = vsel %vm646, %v838, 0.0
        %933 = vadd.xlane.f32.xlu0 %v932
        %v934 = vpop.xlane.xlu0 %933
        %v935 = vrcp.pop %v841
        %v936 = vmul.f32 %v776, %v935
        %v937 = vrcp.pop %v844
        %v938 = vmul.f32 %v778, %v937
        %v939 = vrcp.pop %v847
        %v940 = vmul.f32 %v780, %v939
        %v941 = vrcp.pop %v850
        %v942 = vmul.f32 %v782, %v941
        %v943 = vrcp.pop %v853
        %v944 = vmul.f32 %v784, %v943
        %v945 = vrcp.pop %v856
        %v946 = vmul.f32 %v786, %v945
        %v947 = vrcp.pop %v859
        %v948 = vmul.f32 %v788, %v947
        %v949 = vrcp.pop %v862
        %v950 = vmul.f32 %v790, %v949
        %v951 = vrcp.pop %v865
        %v952 = vmul.f32 %v792, %v951
        %v953 = vrcp.pop %v868
        %v954 = vmul.f32 %v794, %v953
        %v955 = vrcp.pop %v871
        %v956 = vmul.f32 %v796, %v955
        %v957 = vrcp.pop %v874
        %v958 = vmul.f32 %v798, %v957
        %v959 = vrcp.pop %v877
        %v960 = vmul.f32 %v800, %v959
        %v961 = vrcp.pop %v880
        %v962 = vmul.f32 %v802, %v961
        %v963 = vrcp.pop %v883
        %v964 = vmul.f32 %v804, %v963
        %v965 = vrcp.pop %v886
        %v966 = vmul.f32 %v806, %v965
        %v967 = vrcp.pop %v889
        %v968 = vmul.f32 %v808, %v967
        %v969 = vrcp.pop %v892
        %v970 = vmul.f32 %v810, %v969
        %v971 = vrcp.pop %v895
        %v972 = vmul.f32 %v812, %v971
        %v973 = vrcp.pop %v898
        %v974 = vmul.f32 %v814, %v973
        %v975 = vrcp.pop %v901
        %v976 = vmul.f32 %v816, %v975
        %v977 = vrcp.pop %v904
        %v978 = vmul.f32 %v818, %v977
        %v979 = vrcp.pop %v907
        %v980 = vmul.f32 %v820, %v979
        %v981 = vrcp.pop %v910
        %v982 = vmul.f32 %v822, %v981
        %v983 = vrcp.pop %v913
        %v984 = vmul.f32 %v824, %v983
        %v985 = vrcp.pop %v916
        %v986 = vmul.f32 %v826, %v985
        %v987 = vrcp.pop %v919
        %v988 = vmul.f32 %v828, %v987
        %v989 = vrcp.pop %v922
        %v990 = vmul.f32 %v830, %v989
        %v991 = vrcp.pop %v925
        %v992 = vmul.f32 %v832, %v991
        %v993 = vrcp.pop %v928
        %v994 = vmul.f32 %v834, %v993
        %v995 = vrcp.pop %v931
        %v996 = vmul.f32 %v836, %v995
        %v997 = vrcp.pop %v934
        %v998 = vmul.f32 %v838, %v997
        %999 = vst.msk [vmem:[%s257] sm:$0xff] %vm646, %v936
        %1000 = vst.msk [vmem:[%s257 + $0x8] sm:$0xff] %vm646, %v938
        %1001 = vst.msk [vmem:[%s257 + $0x10] sm:$0xff] %vm646, %v940
        %1002 = vst.msk [vmem:[%s257 + $0x18] sm:$0xff] %vm646, %v942
        %1003 = vst.msk [vmem:[%s257 + $0x20] sm:$0xff] %vm646, %v944
        %1004 = vst.msk [vmem:[%s257 + $0x28] sm:$0xff] %vm646, %v946
        %1005 = vst.msk [vmem:[%s257 + $0x30] sm:$0xff] %vm646, %v948
        %1006 = vst.msk [vmem:[%s257 + $0x38] sm:$0xff] %vm646, %v950
        %1007 = vst.msk [vmem:[%s257 + $0x40] sm:$0xff] %vm646, %v952
        %1008 = vst.msk [vmem:[%s257 + $0x48] sm:$0xff] %vm646, %v954
        %1009 = vst.msk [vmem:[%s257 + $0x50] sm:$0xff] %vm646, %v956
        %1010 = vst.msk [vmem:[%s257 + $0x58] sm:$0xff] %vm646, %v958
        %1011 = vst.msk [vmem:[%s257 + $0x60] sm:$0xff] %vm646, %v960
        %1012 = vst.msk [vmem:[%s257 + $0x68] sm:$0xff] %vm646, %v962
        %1013 = vst.msk [vmem:[%s257 + $0x70] sm:$0xff] %vm646, %v964
        %1014 = vst.msk [vmem:[%s257 + $0x78] sm:$0xff] %vm646, %v966
        %1015 = vst.msk [vmem:[%s257 + $0x80] sm:$0xff] %vm646, %v968
        %1016 = vst.msk [vmem:[%s257 + $0x88] sm:$0xff] %vm646, %v970
        %1017 = vst.msk [vmem:[%s257 + $0x90] sm:$0xff] %vm646, %v972
        %1018 = vst.msk [vmem:[%s257 + $0x98] sm:$0xff] %vm646, %v974
        %1019 = vst.msk [vmem:[%s257 + $0xa0] sm:$0xff] %vm646, %v976
        %1020 = vst.msk [vmem:[%s257 + $0xa8] sm:$0xff] %vm646, %v978
        %1021 = vst.msk [vmem:[%s257 + $0xb0] sm:$0xff] %vm646, %v980
        %1022 = vst.msk [vmem:[%s257 + $0xb8] sm:$0xff] %vm646, %v982
        %1023 = vst.msk [vmem:[%s257 + $0xc0] sm:$0xff] %vm646, %v984
        %1024 = vst.msk [vmem:[%s257 + $0xc8] sm:$0xff] %vm646, %v986
        %1025 = vst.msk [vmem:[%s257 + $0xd0] sm:$0xff] %vm646, %v988
        %1026 = vst.msk [vmem:[%s257 + $0xd8] sm:$0xff] %vm646, %v990
        %1027 = vst.msk [vmem:[%s257 + $0xe0] sm:$0xff] %vm646, %v992
        %1028 = vst.msk [vmem:[%s257 + $0xe8] sm:$0xff] %vm646, %v994
        %1029 = vst.msk [vmem:[%s257 + $0xf0] sm:$0xff] %vm646, %v996
        %1030 = vst.msk [vmem:[%s257 + $0xf8] sm:$0xff] %vm646, %v998
        %v1031 = vsel %vm646, %v936, 1.0
        %v1032 = vsel %vm646, %v938, 1.0
        %v1033 = vsel %vm646, %v940, 1.0
        %v1034 = vsel %vm646, %v942, 1.0
        %v1035 = vsel %vm646, %v944, 1.0
        %v1036 = vsel %vm646, %v946, 1.0
        %v1037 = vsel %vm646, %v948, 1.0
        %v1038 = vsel %vm646, %v950, 1.0
        %v1039 = vsel %vm646, %v952, 1.0
        %v1040 = vsel %vm646, %v954, 1.0
        %v1041 = vsel %vm646, %v956, 1.0
        %v1042 = vsel %vm646, %v958, 1.0
        %v1043 = vsel %vm646, %v960, 1.0
        %v1044 = vsel %vm646, %v962, 1.0
        %v1045 = vsel %vm646, %v964, 1.0
        %v1046 = vsel %vm646, %v966, 1.0
        %v1047 = vsel %vm646, %v968, 1.0
        %v1048 = vsel %vm646, %v970, 1.0
        %v1049 = vsel %vm646, %v972, 1.0
        %v1050 = vsel %vm646, %v974, 1.0
        %v1051 = vsel %vm646, %v976, 1.0
        %v1052 = vsel %vm646, %v978, 1.0
        %v1053 = vsel %vm646, %v980, 1.0
        %v1054 = vsel %vm646, %v982, 1.0
        %v1055 = vsel %vm646, %v984, 1.0
        %v1056 = vsel %vm646, %v986, 1.0
        %v1057 = vsel %vm646, %v988, 1.0
        %v1058 = vsel %vm646, %v990, 1.0
        %v1059 = vsel %vm646, %v992, 1.0
        %v1060 = vsel %vm646, %v994, 1.0
        %v1061 = vsel %vm646, %v996, 1.0
        %v1062 = vsel %vm646, %v998, 1.0
        %v1063 = vpack.c.bf16 %v1032, %v1031
        %v1064 = vpack.c.bf16 %v1034, %v1033
        %v1065 = vpack.c.bf16 %v1036, %v1035
        %v1066 = vpack.c.bf16 %v1038, %v1037
        %v1067 = vpack.c.bf16 %v1040, %v1039
        %v1068 = vpack.c.bf16 %v1042, %v1041
        %v1069 = vpack.c.bf16 %v1044, %v1043
        %v1070 = vpack.c.bf16 %v1046, %v1045
        %v1071 = vpack.c.bf16 %v1048, %v1047
        %v1072 = vpack.c.bf16 %v1050, %v1049
        %v1073 = vpack.c.bf16 %v1052, %v1051
        %v1074 = vpack.c.bf16 %v1054, %v1053
        %v1075 = vpack.c.bf16 %v1056, %v1055
        %v1076 = vpack.c.bf16 %v1058, %v1057
        %v1077 = vpack.c.bf16 %v1060, %v1059
        %v1078 = vpack.c.bf16 %v1062, %v1061
        %v1095 = vunpack.c.l.b16 %v1063
        %v1096 = vunpack.c.h.b16 %v1063
        %v1097 = vunpack.c.l.b16 %v1064
        %v1098 = vunpack.c.h.b16 %v1064
        %v1099 = vunpack.c.l.b16 %v1065
        %v1100 = vunpack.c.h.b16 %v1065
        %v1101 = vunpack.c.l.b16 %v1066
        %v1102 = vunpack.c.h.b16 %v1066
        %v1103 = vunpack.c.l.b16 %v1067
        %v1104 = vunpack.c.h.b16 %v1067
        %v1105 = vunpack.c.l.b16 %v1068
        %v1106 = vunpack.c.h.b16 %v1068
        %v1107 = vunpack.c.l.b16 %v1069
        %v1108 = vunpack.c.h.b16 %v1069
        %v1109 = vunpack.c.l.b16 %v1070
        %v1110 = vunpack.c.h.b16 %v1070
        %v1111 = vunpack.c.l.b16 %v1071
        %v1112 = vunpack.c.h.b16 %v1071
        %v1113 = vunpack.c.l.b16 %v1072
        %v1114 = vunpack.c.h.b16 %v1072
        %v1115 = vunpack.c.l.b16 %v1073
        %v1116 = vunpack.c.h.b16 %v1073
        %v1117 = vunpack.c.l.b16 %v1074
        %v1118 = vunpack.c.h.b16 %v1074
        %v1119 = vunpack.c.l.b16 %v1075
        %v1120 = vunpack.c.h.b16 %v1075
        %v1121 = vunpack.c.l.b16 %v1076
        %v1122 = vunpack.c.h.b16 %v1076
        %v1123 = vunpack.c.l.b16 %v1077
        %v1124 = vunpack.c.h.b16 %v1077
        %v1125 = vunpack.c.l.b16 %v1078
        %v1126 = vunpack.c.h.b16 %v1078
        %v1127 = vpack.c.b16 %v1095, %v1095
        %v1128 = vpack.c.b16 %v1096, %v1096
        %v1129 = vpack.c.b16 %v1097, %v1097
        %v1130 = vpack.c.b16 %v1098, %v1098
        %v1131 = vpack.c.b16 %v1099, %v1099
        %v1132 = vpack.c.b16 %v1100, %v1100
        %v1133 = vpack.c.b16 %v1101, %v1101
        %v1134 = vpack.c.b16 %v1102, %v1102
        %v1135 = vpack.c.b16 %v1103, %v1103
        %v1136 = vpack.c.b16 %v1104, %v1104
        %v1137 = vpack.c.b16 %v1105, %v1105
        %v1138 = vpack.c.b16 %v1106, %v1106
        %v1139 = vpack.c.b16 %v1107, %v1107
        %v1140 = vpack.c.b16 %v1108, %v1108
        %v1141 = vpack.c.b16 %v1109, %v1109
        %v1142 = vpack.c.b16 %v1110, %v1110
        %v1143 = vpack.c.b16 %v1111, %v1111
        %v1144 = vpack.c.b16 %v1112, %v1112
        %v1145 = vpack.c.b16 %v1113, %v1113
        %v1146 = vpack.c.b16 %v1114, %v1114
        %v1147 = vpack.c.b16 %v1115, %v1115
        %v1148 = vpack.c.b16 %v1116, %v1116
        %v1149 = vpack.c.b16 %v1117, %v1117
        %v1150 = vpack.c.b16 %v1118, %v1118
        %v1151 = vpack.c.b16 %v1119, %v1119
        %v1152 = vpack.c.b16 %v1120, %v1120
        %v1153 = vpack.c.b16 %v1121, %v1121
        %v1154 = vpack.c.b16 %v1122, %v1122
        %v1155 = vpack.c.b16 %v1123, %v1123
        %v1156 = vpack.c.b16 %v1124, %v1124
        %v1157 = vpack.c.b16 %v1125, %v1125
        %v1158 = vpack.c.b16 %v1126, %v1126
        %vm1191 = vcmask 248832
        %1192 = vst.msk [vmem:[%s263] sm:$0xf] %vm1191, %v1127
        %1193 = vst.msk [vmem:[%s263 + $0x4] sm:$0xf] %vm1191, %v1128
        %1194 = vst.msk [vmem:[%s263 + $0x8] sm:$0xf] %vm1191, %v1129
        %1195 = vst.msk [vmem:[%s263 + $0xc] sm:$0xf] %vm1191, %v1130
        %1196 = vst.msk [vmem:[%s263 + $0x10] sm:$0xf] %vm1191, %v1131
        %1197 = vst.msk [vmem:[%s263 + $0x14] sm:$0xf] %vm1191, %v1132
        %1198 = vst.msk [vmem:[%s263 + $0x18] sm:$0xf] %vm1191, %v1133
        %1199 = vst.msk [vmem:[%s263 + $0x1c] sm:$0xf] %vm1191, %v1134
        %1200 = vst.msk [vmem:[%s263 + $0x20] sm:$0xf] %vm1191, %v1135
        %1201 = vst.msk [vmem:[%s263 + $0x24] sm:$0xf] %vm1191, %v1136
        %1202 = vst.msk [vmem:[%s263 + $0x28] sm:$0xf] %vm1191, %v1137
        %1203 = vst.msk [vmem:[%s263 + $0x2c] sm:$0xf] %vm1191, %v1138
        %1204 = vst.msk [vmem:[%s263 + $0x30] sm:$0xf] %vm1191, %v1139
        %1205 = vst.msk [vmem:[%s263 + $0x34] sm:$0xf] %vm1191, %v1140
        %1206 = vst.msk [vmem:[%s263 + $0x38] sm:$0xf] %vm1191, %v1141
        %1207 = vst.msk [vmem:[%s263 + $0x3c] sm:$0xf] %vm1191, %v1142
        %1208 = vst.msk [vmem:[%s263 + $0x40] sm:$0xf] %vm1191, %v1143
        %1209 = vst.msk [vmem:[%s263 + $0x44] sm:$0xf] %vm1191, %v1144
        %1210 = vst.msk [vmem:[%s263 + $0x48] sm:$0xf] %vm1191, %v1145
        %1211 = vst.msk [vmem:[%s263 + $0x4c] sm:$0xf] %vm1191, %v1146
        %1212 = vst.msk [vmem:[%s263 + $0x50] sm:$0xf] %vm1191, %v1147
        %1213 = vst.msk [vmem:[%s263 + $0x54] sm:$0xf] %vm1191, %v1148
        %1214 = vst.msk [vmem:[%s263 + $0x58] sm:$0xf] %vm1191, %v1149
        %1215 = vst.msk [vmem:[%s263 + $0x5c] sm:$0xf] %vm1191, %v1150
        %1216 = vst.msk [vmem:[%s263 + $0x60] sm:$0xf] %vm1191, %v1151
        %1217 = vst.msk [vmem:[%s263 + $0x64] sm:$0xf] %vm1191, %v1152
        %1218 = vst.msk [vmem:[%s263 + $0x68] sm:$0xf] %vm1191, %v1153
        %1219 = vst.msk [vmem:[%s263 + $0x6c] sm:$0xf] %vm1191, %v1154
        %1220 = vst.msk [vmem:[%s263 + $0x70] sm:$0xf] %vm1191, %v1155
        %1221 = vst.msk [vmem:[%s263 + $0x74] sm:$0xf] %vm1191, %v1156
        %1222 = vst.msk [vmem:[%s263 + $0x78] sm:$0xf] %vm1191, %v1157
        %1223 = vst.msk [vmem:[%s263 + $0x7c] sm:$0xf] %vm1191, %v1158
        %v1224 = vld [vmem:[#allocation3] sm:$0xff]
        %v1225 = vld [vmem:[#allocation3 + $0x8] sm:$0xff]
        %v1226 = vld [vmem:[#allocation3 + $0x10] sm:$0xff]
        %v1227 = vld [vmem:[#allocation3 + $0x18] sm:$0x3f]
        %1228 = vxpose.xlu0.b32.start [1/16] %v936, 128
        %1229 = vxpose.xlu0.b32.cont [2/16] %v938, 128
        %1230 = vxpose.xlu0.b32.cont [3/16] %v940, 128
        %1231 = vxpose.xlu0.b32.cont [4/16] %v942, 128
        %1232 = vxpose.xlu0.b32.cont [5/16] %v944, 128
        %1233 = vxpose.xlu0.b32.cont [6/16] %v946, 128
        %1234 = vxpose.xlu0.b32.cont [7/16] %v948, 128
        %1235 = vxpose.xlu0.b32.cont [8/16] %v950, 128
        %1236 = vxpose.xlu0.b32.cont [9/16] %v952, 128
        %1237 = vxpose.xlu0.b32.cont [10/16] %v954, 128
        %1238 = vxpose.xlu0.b32.cont [11/16] %v956, 128
        %1239 = vxpose.xlu0.b32.cont [12/16] %v958, 128
        %1240 = vxpose.xlu0.b32.cont [13/16] %v960, 128
        %1241 = vxpose.xlu0.b32.cont [14/16] %v962, 128
        %1242 = vxpose.xlu0.b32.cont [15/16] %v964, 128
        %1243 = vxpose.xlu0.b32.end [16/16] %v966, 128
        %v1244 = vpop.trf.xlu0
        %v1245 = vpop.trf.xlu0
        %v1246 = vpop.trf.xlu0
        %v1247 = vpop.trf.xlu0
        %v1248 = vpop.trf.xlu0
        %v1249 = vpop.trf.xlu0
        %v1250 = vpop.trf.xlu0
        %v1251 = vpop.trf.xlu0
        %v1252 = vpop.trf.xlu0
        %v1253 = vpop.trf.xlu0
        %v1254 = vpop.trf.xlu0
        %v1255 = vpop.trf.xlu0
        %v1256 = vpop.trf.xlu0
        %v1257 = vpop.trf.xlu0
        %v1258 = vpop.trf.xlu0
        %v1259 = vpop.trf.xlu0
        %1260 = vxpose.xlu0.b32.start [1/16] %v968, 128
        %1261 = vxpose.xlu0.b32.cont [2/16] %v970, 128
        %1262 = vxpose.xlu0.b32.cont [3/16] %v972, 128
        %1263 = vxpose.xlu0.b32.cont [4/16] %v974, 128
        %1264 = vxpose.xlu0.b32.cont [5/16] %v976, 128
        %1265 = vxpose.xlu0.b32.cont [6/16] %v978, 128
        %1266 = vxpose.xlu0.b32.cont [7/16] %v980, 128
        %1267 = vxpose.xlu0.b32.cont [8/16] %v982, 128
        %1268 = vxpose.xlu0.b32.cont [9/16] %v984, 128
        %1269 = vxpose.xlu0.b32.cont [10/16] %v986, 128
        %1270 = vxpose.xlu0.b32.cont [11/16] %v988, 128
        %1271 = vxpose.xlu0.b32.cont [12/16] %v990, 128
        %1272 = vxpose.xlu0.b32.cont [13/16] %v992, 128
        %1273 = vxpose.xlu0.b32.cont [14/16] %v994, 128
        %1274 = vxpose.xlu0.b32.cont [15/16] %v996, 128
        %1275 = vxpose.xlu0.b32.end [16/16] %v998, 128
        %v1276 = vpop.trf.xlu0
        %v1277 = vpop.trf.xlu0
        %v1278 = vpop.trf.xlu0
        %v1279 = vpop.trf.xlu0
        %v1280 = vpop.trf.xlu0
        %v1281 = vpop.trf.xlu0
        %v1282 = vpop.trf.xlu0
        %v1283 = vpop.trf.xlu0
        %v1284 = vpop.trf.xlu0
        %v1285 = vpop.trf.xlu0
        %v1286 = vpop.trf.xlu0
        %v1287 = vpop.trf.xlu0
        %v1288 = vpop.trf.xlu0
        %v1289 = vpop.trf.xlu0
        %v1290 = vpop.trf.xlu0
        %v1291 = vpop.trf.xlu0
        %1324 = vrot.lane.b32.xlu0 %v488, 98
        %v1325 = vpop.permute.xlu0 %1324
        %1326 = vrot.lane.b32.xlu0 %v493, 98
        %v1327 = vpop.permute.xlu0 %1326
        %1328 = vrot.lane.b32.xlu0 %v498, 98
        %v1329 = vpop.permute.xlu0 %1328
        %1330 = vrot.lane.b32.xlu0 %v503, 98
        %v1331 = vpop.permute.xlu0 %1330
        %1332 = vrot.lane.b32.xlu0 %v508, 98
        %v1333 = vpop.permute.xlu0 %1332
        %1334 = vrot.lane.b32.xlu0 %v513, 98
        %v1335 = vpop.permute.xlu0 %1334
        %1336 = vrot.lane.b32.xlu0 %v518, 98
        %v1337 = vpop.permute.xlu0 %1336
        %1338 = vrot.lane.b32.xlu0 %v523, 98
        %v1339 = vpop.permute.xlu0 %1338
        %1340 = vrot.lane.b32.xlu0 %v528, 98
        %v1341 = vpop.permute.xlu0 %1340
        %1342 = vrot.lane.b32.xlu0 %v533, 98
        %v1343 = vpop.permute.xlu0 %1342
        %1344 = vrot.lane.b32.xlu0 %v538, 98
        %v1345 = vpop.permute.xlu0 %1344
        %1346 = vrot.lane.b32.xlu0 %v543, 98
        %v1347 = vpop.permute.xlu0 %1346
        %1348 = vrot.lane.b32.xlu0 %v548, 98
        %v1349 = vpop.permute.xlu0 %1348
        %1350 = vrot.lane.b32.xlu0 %v553, 98
        %v1351 = vpop.permute.xlu0 %1350
        %1352 = vrot.lane.b32.xlu0 %v558, 98
        %v1353 = vpop.permute.xlu0 %1352
        %1354 = vrot.lane.b32.xlu0 %v563, 98
        %v1355 = vpop.permute.xlu0 %1354
        %1356 = vrot.lane.b32.xlu0 %v568, 98
        %v1357 = vpop.permute.xlu0 %1356
        %1358 = vrot.lane.b32.xlu0 %v573, 98
        %v1359 = vpop.permute.xlu0 %1358
        %1360 = vrot.lane.b32.xlu0 %v578, 98
        %v1361 = vpop.permute.xlu0 %1360
        %1362 = vrot.lane.b32.xlu0 %v583, 98
        %v1363 = vpop.permute.xlu0 %1362
        %1364 = vrot.lane.b32.xlu0 %v588, 98
        %v1365 = vpop.permute.xlu0 %1364
        %1366 = vrot.lane.b32.xlu0 %v593, 98
        %v1367 = vpop.permute.xlu0 %1366
        %1368 = vrot.lane.b32.xlu0 %v598, 98
        %v1369 = vpop.permute.xlu0 %1368
        %1370 = vrot.lane.b32.xlu0 %v603, 98
        %v1371 = vpop.permute.xlu0 %1370
        %1372 = vrot.lane.b32.xlu0 %v608, 98
        %v1373 = vpop.permute.xlu0 %1372
        %1374 = vrot.lane.b32.xlu0 %v613, 98
        %v1375 = vpop.permute.xlu0 %1374
        %1376 = vrot.lane.b32.xlu0 %v618, 98
        %v1377 = vpop.permute.xlu0 %1376
        %1378 = vrot.lane.b32.xlu0 %v623, 98
        %v1379 = vpop.permute.xlu0 %1378
        %1380 = vrot.lane.b32.xlu0 %v628, 98
        %v1381 = vpop.permute.xlu0 %1380
        %1382 = vrot.lane.b32.xlu0 %v633, 98
        %v1383 = vpop.permute.xlu0 %1382
        %1384 = vrot.lane.b32.xlu0 %v638, 98
        %v1385 = vpop.permute.xlu0 %1384
        %1386 = vrot.lane.b32.xlu0 %v643, 98
        %v1387 = vpop.permute.xlu0 %1386
        %1420 = vmatprep.subr.mxu0 0.0
        %1421 = vmatpush1.msra.mxu0 %v1325
        %1422 = vmatprep.subr.mxu0 0.0
        %1423 = vmatpush1.msra.mxu0 %v1327
        %1424 = vmatprep.subr.mxu0 0.0
        %1425 = vmatpush1.msra.mxu0 %v1329
        %1426 = vmatprep.subr.mxu0 0.0
        %1427 = vmatpush1.msra.mxu0 %v1331
        %1428 = vmatprep.subr.mxu0 0.0
        %1429 = vmatpush1.msra.mxu0 %v1333
        %1430 = vmatprep.subr.mxu0 0.0
        %1431 = vmatpush1.msra.mxu0 %v1335
        %1432 = vmatprep.subr.mxu0 0.0
        %1433 = vmatpush1.msra.mxu0 %v1337
        %1434 = vmatprep.subr.mxu0 0.0
        %1435 = vmatpush1.msra.mxu0 %v1339
        %1436 = vmatprep.subr.mxu0 0.0
        %1437 = vmatpush1.msra.mxu0 %v1341
        %1438 = vmatprep.subr.mxu0 0.0
        %1439 = vmatpush1.msra.mxu0 %v1343
        %1440 = vmatprep.subr.mxu0 0.0
        %1441 = vmatpush1.msra.mxu0 %v1345
        %1442 = vmatprep.subr.mxu0 0.0
        %1443 = vmatpush1.msra.mxu0 %v1347
        %1444 = vmatprep.subr.mxu0 0.0
        %1445 = vmatpush1.msra.mxu0 %v1349
        %1446 = vmatprep.subr.mxu0 0.0
        %1447 = vmatpush1.msra.mxu0 %v1351
        %1448 = vmatprep.subr.mxu0 0.0
        %1449 = vmatpush1.msra.mxu0 %v1353
        %1450 = vmatprep.subr.mxu0 0.0
        %1451 = vmatpush1.msra.mxu0 %v1355
        %1452 = vmatprep.subr.mxu0 0.0
        %1453 = vmatpush1.msra.mxu0 %v1357
        %1454 = vmatprep.subr.mxu0 0.0
        %1455 = vmatpush1.msra.mxu0 %v1359
        %1456 = vmatprep.subr.mxu0 0.0
        %1457 = vmatpush1.msra.mxu0 %v1361
        %1458 = vmatprep.subr.mxu0 0.0
        %1459 = vmatpush1.msra.mxu0 %v1363
        %1460 = vmatprep.subr.mxu0 0.0
        %1461 = vmatpush1.msra.mxu0 %v1365
        %1462 = vmatprep.subr.mxu0 0.0
        %1463 = vmatpush1.msra.mxu0 %v1367
        %1464 = vmatprep.subr.mxu0 0.0
        %1465 = vmatpush1.msra.mxu0 %v1369
        %1466 = vmatprep.subr.mxu0 0.0
        %1467 = vmatpush1.msra.mxu0 %v1371
        %1468 = vmatprep.subr.mxu0 0.0
        %1469 = vmatpush1.msra.mxu0 %v1373
        %1470 = vmatprep.subr.mxu0 0.0
        %1471 = vmatpush1.msra.mxu0 %v1375
        %1472 = vmatprep.subr.mxu0 0.0
        %1473 = vmatpush1.msra.mxu0 %v1377
        %1474 = vmatprep.subr.mxu0 0.0
        %1475 = vmatpush1.msra.mxu0 %v1379
        %1476 = vmatprep.subr.mxu0 0.0
        %1477 = vmatpush1.msra.mxu0 %v1381
        %1478 = vmatprep.subr.mxu0 0.0
        %1479 = vmatpush1.msra.mxu0 %v1383
        %1480 = vmatprep.subr.mxu0 0.0
        %1481 = vmatpush1.msra.mxu0 %v1385
        %1482 = vmatprep.subr.mxu0 0.0
        %1483 = vmatpush1.msra.mxu0 %v1387
        %1484 = vmatprep.mubr.f32.mxu0 %v1276
        %1485 = vmatmul.mubr.f32.gmra.mrb[0].mxu0 %v1244
        %v1486 = vpop.f32.mrb[0].mxu0
        %v1487 = vadd.f32 0.0, %v1486
        %v1488 = vpop.f32.mrb[0].mxu0
        %1489 = vmatprep.mubr.f32.mxu0 %v1277
        %1490 = vmatmul.mubr.f32.gmra.mrb[0].mxu0 %v1245
        %v1491 = vpop.f32.mrb[0].mxu0
        %v1492 = vadd.f32 0.0, %v1491
        %v1493 = vpop.f32.mrb[0].mxu0
        %1494 = vmatprep.mubr.f32.mxu0 %v1278
        %1495 = vmatmul.mubr.f32.gmra.mrb[0].mxu0 %v1246
        %v1496 = vpop.f32.mrb[0].mxu0
        %v1497 = vadd.f32 0.0, %v1496
        %v1498 = vpop.f32.mrb[0].mxu0
        %1499 = vmatprep.mubr.f32.mxu0 %v1279
        %1500 = vmatmul.mubr.f32.gmra.mrb[0].mxu0 %v1247
        %v1501 = vpop.f32.mrb[0].mxu0
        %v1502 = vadd.f32 0.0, %v1501
        %v1503 = vpop.f32.mrb[0].mxu0
        %1504 = vdwg.mxu0
        %v1505 = vadd.f32 %v1224, %v1487
        %v1506 = vadd.f32 %v1225, %v1492
        %v1507 = vadd.f32 %v1226, %v1497
        %v1508 = vadd.f32 %v1227, %v1502
        %1509 = vst.msk [vmem:[#allocation3] sm:$0xff] %vm324, %v1505
        %1510 = vst.msk [vmem:[#allocation3 + $0x8] sm:$0xff] %vm324, %v1506
        %1511 = vst.msk [vmem:[#allocation3 + $0x10] sm:$0xff] %vm324, %v1507
        %vm1512 = vcmask 259072
        %1513 = vst.msk [vmem:[#allocation3 + $0x18] sm:$0x3f] %vm1512, %v1508
        %v1514 = vld [vmem:[#allocation2] sm:$0xff]
        %v1515 = vld [vmem:[#allocation2 + $0x8] sm:$0xff]
        %v1516 = vld [vmem:[#allocation2 + $0x10] sm:$0xff]
        %v1517 = vld [vmem:[#allocation2 + $0x18] sm:$0x3f]
        %1518 = vmatprep.subr.mxu0 0.0
        %1519 = vmatpush1.msra.mxu0 %v936
        %1520 = vmatprep.subr.mxu0 0.0
        %1521 = vmatpush1.msra.mxu0 %v938
        %1522 = vmatprep.subr.mxu0 0.0
        %1523 = vmatpush1.msra.mxu0 %v940
        %1524 = vmatprep.subr.mxu0 0.0
        %1525 = vmatpush1.msra.mxu0 %v942
        %1526 = vmatprep.subr.mxu0 0.0
        %1527 = vmatpush1.msra.mxu0 %v944
        %1528 = vmatprep.subr.mxu0 0.0
        %1529 = vmatpush1.msra.mxu0 %v946
        %1530 = vmatprep.subr.mxu0 0.0
        %1531 = vmatpush1.msra.mxu0 %v948
        %1532 = vmatprep.subr.mxu0 0.0
        %1533 = vmatpush1.msra.mxu0 %v950
        %1534 = vmatprep.subr.mxu0 0.0
        %1535 = vmatpush1.msra.mxu0 %v952
        %1536 = vmatprep.subr.mxu0 0.0
        %1537 = vmatpush1.msra.mxu0 %v954
        %1538 = vmatprep.subr.mxu0 0.0
        %1539 = vmatpush1.msra.mxu0 %v956
        %1540 = vmatprep.subr.mxu0 0.0
        %1541 = vmatpush1.msra.mxu0 %v958
        %1542 = vmatprep.subr.mxu0 0.0
        %1543 = vmatpush1.msra.mxu0 %v960
        %1544 = vmatprep.subr.mxu0 0.0
        %1545 = vmatpush1.msra.mxu0 %v962
        %1546 = vmatprep.subr.mxu0 0.0
        %1547 = vmatpush1.msra.mxu0 %v964
        %1548 = vmatprep.subr.mxu0 0.0
        %1549 = vmatpush1.msra.mxu0 %v966
        %1550 = vmatprep.subr.mxu0 0.0
        %1551 = vmatpush1.msra.mxu0 %v968
        %1552 = vmatprep.subr.mxu0 0.0
        %1553 = vmatpush1.msra.mxu0 %v970
        %1554 = vmatprep.subr.mxu0 0.0
        %1555 = vmatpush1.msra.mxu0 %v972
        %1556 = vmatprep.subr.mxu0 0.0
        %1557 = vmatpush1.msra.mxu0 %v974
        %1558 = vmatprep.subr.mxu0 0.0
        %1559 = vmatpush1.msra.mxu0 %v976
        %1560 = vmatprep.subr.mxu0 0.0
        %1561 = vmatpush1.msra.mxu0 %v978
        %1562 = vmatprep.subr.mxu0 0.0
        %1563 = vmatpush1.msra.mxu0 %v980
        %1564 = vmatprep.subr.mxu0 0.0
        %1565 = vmatpush1.msra.mxu0 %v982
        %1566 = vmatprep.subr.mxu0 0.0
        %1567 = vmatpush1.msra.mxu0 %v984
        %1568 = vmatprep.subr.mxu0 0.0
        %1569 = vmatpush1.msra.mxu0 %v986
        %1570 = vmatprep.subr.mxu0 0.0
        %1571 = vmatpush1.msra.mxu0 %v988
        %1572 = vmatprep.subr.mxu0 0.0
        %1573 = vmatpush1.msra.mxu0 %v990
        %1574 = vmatprep.subr.mxu0 0.0
        %1575 = vmatpush1.msra.mxu0 %v992
        %1576 = vmatprep.subr.mxu0 0.0
        %1577 = vmatpush1.msra.mxu0 %v994
        %1578 = vmatprep.subr.mxu0 0.0
        %1579 = vmatpush1.msra.mxu0 %v996
        %1580 = vmatprep.subr.mxu0 0.0
        %1581 = vmatpush1.msra.mxu0 %v998
        %1582 = vmatprep.mubr.f32.mxu0 %v1276
        %1583 = vmatmul.mubr.f32.gmra.mrb[0].mxu0 %v1244
        %v1584 = vpop.f32.mrb[0].mxu0
        %v1585 = vadd.f32 0.0, %v1584
        %v1586 = vpop.f32.mrb[0].mxu0
        %1587 = vmatprep.mubr.f32.mxu0 %v1277
        %1588 = vmatmul.mubr.f32.gmra.mrb[0].mxu0 %v1245
        %v1589 = vpop.f32.mrb[0].mxu0
        %v1590 = vadd.f32 0.0, %v1589
        %v1591 = vpop.f32.mrb[0].mxu0
        %1592 = vmatprep.mubr.f32.mxu0 %v1278
        %1593 = vmatmul.mubr.f32.gmra.mrb[0].mxu0 %v1246
        %v1594 = vpop.f32.mrb[0].mxu0
        %v1595 = vadd.f32 0.0, %v1594
        %v1596 = vpop.f32.mrb[0].mxu0
        %1597 = vmatprep.mubr.f32.mxu0 %v1279
        %1598 = vmatmul.mubr.f32.gmra.mrb[0].mxu0 %v1247
        %v1599 = vpop.f32.mrb[0].mxu0
        %v1600 = vadd.f32 0.0, %v1599
        %v1601 = vpop.f32.mrb[0].mxu0
        %1602 = vdwg.mxu0
        %v1603 = vadd.f32 %v1514, %v1585
        %v1604 = vadd.f32 %v1515, %v1590
        %v1605 = vadd.f32 %v1516, %v1595
        %v1606 = vadd.f32 %v1517, %v1600
        %1607 = vst.msk [vmem:[#allocation2] sm:$0xff] %vm646, %v1603
        %1608 = vst.msk [vmem:[#allocation2 + $0x8] sm:$0xff] %vm646, %v1604
        %1609 = vst.msk [vmem:[#allocation2 + $0x10] sm:$0xff] %vm646, %v1605
        %vm1610 = vcmask 242688
        %1611 = vst.msk [vmem:[#allocation2 + $0x18] sm:$0x3f] %vm1610, %v1606
        %p1612 = scmp.eq.s32.totalorder %s20, 1
        // Predicated region
        $region37: #{tpu_custom_call.1} parent=31 // pred_check
          %p1613 = pneg %p1612
        $region38: #{tpu_custom_call.1} parent=31 // pred_check_branch
          %1615 = sbr.rel (%p1613) target = $region40
        $region39: #{tpu_custom_call.1} parent=31 // pred_region
          %v1616 = vld [vmem:[#allocation2] sm:$0xff]
          %v1617 = vld [vmem:[#allocation2 + $0x8] sm:$0xff]
          %v1618 = vld [vmem:[#allocation2 + $0x10] sm:$0xff]
          %v1619 = vld [vmem:[#allocation2 + $0x18] sm:$0x3f]
          %v1620 = vlaneseq
          %v1621 = vshrl.u32 %v1620, 7
          %v1622 = vadd.s32 %v1621, 8
          %v1623 = vadd.s32 %v1621, 16
          %v1624 = vadd.s32 %v1621, 24
          %v1625 = vlaneseq
          %v1626 = vand.u32 %v1625, 127
          %vm1627 = vcmp.eq.s32.totalorder %v1621, %v1626
          %vm1628 = vcmp.eq.s32.totalorder %v1622, %v1626
          %vm1629 = vcmp.eq.s32.totalorder %v1623, %v1626
          %vm1630 = vcmp.eq.s32.totalorder %v1624, %v1626
          %v1631 = vsel %vm1627, 1, 0
          %v1632 = vsel %vm1628, 1, 0
          %v1633 = vsel %vm1629, 1, 0
          %v1634 = vsel %vm1630, 1, 0
          %v1635 = vcvt.s32.f32 %v1631
          %v1636 = vcvt.s32.f32 %v1632
          %v1637 = vcvt.s32.f32 %v1633
          %v1638 = vcvt.s32.f32 %v1634
          %v1639 = vsub.f32 %v1616, %v1635
          %v1640 = vsub.f32 %v1617, %v1636
          %v1641 = vsub.f32 %v1618, %v1637
          %v1642 = vsub.f32 %v1619, %v1638
          %v1643 = vmul.f32 %v1639, %v1639
          %v1644 = vmul.f32 %v1640, %v1640
          %v1645 = vmul.f32 %v1641, %v1641
          %v1646 = vmul.f32 %v1642, %v1642
          %v1647 = vsel %vm646, %v1643, 0.0
          %v1648 = vsel %vm646, %v1644, 0.0
          %v1649 = vadd.f32 %v1647, %v1648
          %v1650 = vsel %vm646, %v1645, 0.0
          %v1651 = vadd.f32 %v1649, %v1650
          %v1652 = vsel %vm1610, %v1646, 0.0
          %v1653 = vadd.f32 %v1651, %v1652
          %1654 = vadd.xlane.f32.xlu0 %v1653
          %v1655 = vpop.xlane.xlu0 %1654
          %v1656 = vrot.slane %v1655, 4
          %v1657 = vadd.f32 %v1655, %v1656
          %v1658 = vrot.slane %v1657, 2
          %v1659 = vadd.f32 %v1657, %v1658
          %v1660 = vrot.slane %v1659, 1
          %v1661 = vadd.f32 %v1659, %v1660
          %s1662 = vtos %v1661
          %v1663 = vstv %s1662
          %v1664 = vrsqrt.pop %v1663
          %v1665 = vmul.f32 %v1663, %v1664
          %vm1666 = vcmp.eq.f32.partialorder %v1663, inf
          %v1667 = vsel %vm1666, %v1663, %v1665
          %vm1668 = vcmp.eq.f32.partialorder %v1663, 0.0
          %v1669 = vand.u32 %v1663, 2147483648
          %v1670 = vsel %vm1668, %v1669, %v1667
          %s1671 = vtos %v1670
          %v1672 = vstv %s1671
          %vm1673 = vcmask 0
          %1674 = vst.msk [vmem:[#allocation5] sm:$0x1] %vm1673, %v1672
        $region40: #{tpu_custom_call.1} parent=31 // pred_fallthru
          _
        %s1675 = smul.u32 32, %s20
        %p1676 = scmp.lt.s32.totalorder %s1675, 63
        %s1677 = scalar_select %p1676, %s1675, 63
        %s1678 = smul.addr %s1677, 8
        %s1679 = scalar_lea.vmem %s3, %s1678
        %s1680 = smul.u32 32, %s20
        %p1681 = scmp.lt.s32.totalorder %s1680, 63
        %s1682 = scalar_select %p1681, %s1680, 63
        %s1683 = smul.addr %s1682, 4
        %s1684 = scalar_lea.vmem %s4, %s1683
        // Predicated region
        $region41: #{tpu_custom_call.1} parent=31 // pred_check
          %p1685 = pneg %p106
        $region42: #{tpu_custom_call.1} parent=31 // pred_check_branch
          %1687 = sbr.rel (%p1685) target = $region44
        $region43: #{tpu_custom_call.1} parent=31 // pred_region
          %s1688 = smul.u32 32, %s20
        $region44: #{tpu_custom_call.1} parent=31 // pred_fallthru
          _
        // Predicated region
        $region45: #{tpu_custom_call.1} parent=31 // pred_check
          %p1689 = pneg %p132
        $region46: #{tpu_custom_call.1} parent=31 // pred_check_branch
          %1691 = sbr.rel (%p1689) target = $region48
        $region47: #{tpu_custom_call.1} parent=31 // pred_region
          %s1692 = smul.u32 32, %s20
        $region48: #{tpu_custom_call.1} parent=31 // pred_fallthru
          _
        // Predicated region
        $region49: #{tpu_custom_call.1} parent=31 // pred_check
          %p1693 = pneg %p153
        $region50: #{tpu_custom_call.1} parent=31 // pred_check_branch
          %1695 = sbr.rel (%p1693) target = $region52
        $region51: #{tpu_custom_call.1} parent=31 // pred_region
          %s1697 = ssub.s32 512, 512
          %1698 = vsyncadd [#allocation4], %s1697
          %s1699 = sshll.u32 [#allocation3], 4
          %s1700 = int_to_ptr.vmem [resolvable:$true] %s1699
          %1705 = dma.vmem_to_hbm [thread:$0]  %s1700, 512, %s5, [#allocation4], 128, 128, 8
        $region52: #{tpu_custom_call.1} parent=31 // pred_fallthru
          _
        // Predicated region
        $region53: #{tpu_custom_call.1} parent=31 // pred_check
          %p1706 = pneg %p174
        $region54: #{tpu_custom_call.1} parent=31 // pred_check_branch
          %1708 = sbr.rel (%p1706) target = $region56
        $region55: #{tpu_custom_call.1} parent=31 // pred_region
          %s1710 = ssub.s32 16, 16
          %1711 = vsyncadd [#allocation6], %s1710
          %s1713 = sshll.u32 [#allocation5], 4
          %s1714 = int_to_ptr.vmem [resolvable:$true] %s1713
          %1716 = dma.vmem_to_hbm [thread:$0]  %s1714, 16, %s6, [#allocation6]
        $region56: #{tpu_custom_call.1} parent=31 // pred_fallthru
          _
        // Predicated region
        $region57: #{tpu_custom_call.1} parent=31 // pred_check
          %p1717 = pneg %p153
        $region58: #{tpu_custom_call.1} parent=31 // pred_check_branch
          %1719 = sbr.rel (%p1717) target = $region60
        $region59: #{tpu_custom_call.1} parent=31 // pred_region
          %1720 = dma.done [#allocation4], 512
        $region60: #{tpu_custom_call.1} parent=31 // pred_fallthru
          _
        // Predicated region
        $region61: #{tpu_custom_call.1} parent=31 // pred_check
          %p1721 = pneg %p174
        $region62: #{tpu_custom_call.1} parent=31 // pred_check_branch
          %1723 = sbr.rel (%p1721) target = $region64
        $region63: #{tpu_custom_call.1} parent=31 // pred_region
          %1724 = dma.done [#allocation6], 16
        $region64: #{tpu_custom_call.1} parent=31 // pred_fallthru
          _
      $region32: #{tpu_custom_call.1} parent=5 // pred_fallthru
        _
      %p1725 = scmp.le.s32.totalorder 2, %s15
      // Predicated region
      $region65: #{tpu_custom_call.1} parent=5 // pred_check
        %p1726 = pneg %p1725
      $region66: #{tpu_custom_call.1} parent=5 // pred_check_branch
        %1728 = sbr.rel (%p1726) target = $region68
      $region67: #{tpu_custom_call.1} parent=5 // pred_region
        %s1729 = ssub.s32 %s15, 2
        // Predicated region
        $region69: #{tpu_custom_call.1} parent=67 // pred_check
          %p1730 = pneg %p112
        $region70: #{tpu_custom_call.1} parent=67 // pred_check_branch
          %1732 = sbr.rel (%p1730) target = $region72
        $region71: #{tpu_custom_call.1} parent=67 // pred_region
          %s1733 = smul.u32 32, %s21
          %p1734 = scmp.lt.s32.totalorder %s1733, 63
          %s1735 = scalar_select %p1734, %s1733, 63
          %s1736 = smul.addr %s1735, 8
          %s1737 = scalar_lea.vmem %s3, %s1736
        $region72: #{tpu_custom_call.1} parent=67 // pred_fallthru
          _
        // Predicated region
        $region73: #{tpu_custom_call.1} parent=67 // pred_check
          %p1738 = pneg %p138
        $region74: #{tpu_custom_call.1} parent=67 // pred_check_branch
          %1740 = sbr.rel (%p1738) target = $region76
        $region75: #{tpu_custom_call.1} parent=67 // pred_region
          %s1741 = smul.u32 32, %s21
          %p1742 = scmp.lt.s32.totalorder %s1741, 63
          %s1743 = scalar_select %p1742, %s1741, 63
          %s1744 = smul.addr %s1743, 4
          %s1745 = scalar_lea.vmem %s4, %s1744
        $region76: #{tpu_custom_call.1} parent=67 // pred_fallthru
          _
      $region68: #{tpu_custom_call.1} parent=5 // pred_fallthru
        _
    $region6: #{tpu_custom_call.1} parent=1 // loop_footer
      %s19 = sadd.s32 1, %s15
    $region7: #{tpu_custom_call.1} parent=1 // loop_footer_branch
      %14 = sbr.rel target = $region3
    $region8: #{tpu_custom_call.1} parent=1 // loop_exit
      _
    %1746 = vsyncpa [#allocation4], 1
    %s1747 = scalar_lea.sflag [#allocation4], 1
    %1748 = vsyncpa %s1747, 1
    %1749 = vsyncpa [#allocation6], 1

</llo_original>
